<compile_context>
chip_gen: v7x
topology: tpu7x:2x2x1
jax: 0.10.0
libtpu: 0.0.40
codegen_flags: <defaults>
</compile_context>

<pallas_src>
import functools
import numpy as np
import jax
import jax.numpy as jnp
from jax import lax
from jax.experimental import pallas as pl
from jax.experimental.pallas import tpu as pltpu


_BN_EPS = 1e-3
_BN_SCALE = 1.0 / np.sqrt(1.0 + _BN_EPS)   # fresh BN (eval): gamma=1, beta=0, mean=0, var=1


# ----------------------------------------------------------------------------
# Fused Pallas kernel: one grid step == B images, channel-major (C, B*H*W)
# ----------------------------------------------------------------------------
def _fused_block_kernel(x_ref, m_ref, ws_ref, w11_ref, w21_ref, w22_ref,
                        wf_ref, bf_ref, o_ref, *, width, scale, activation):
    f32 = jnp.float32
    bf16 = jnp.bfloat16
    lanes = x_ref.shape[-1]                      # B * H * W

    def mm(w_ref, act_f32):
        # Single bf16 MXU pass with f32 accumulation (weights are already bf16).
        return jnp.dot(w_ref[...], act_f32.astype(bf16), preferred_element_type=f32)

    # Merged 1x1 stems of all three branches (BN folded, bias=0): (48, C) @ (C, B*HW).
    stem = jnp.maximum(mm(ws_ref, x_ref[...]), 0.0)            # (48, lanes) f32

    def taps_of(a):
        # 9 lane-rolled, border-masked copies of a (rows, lanes) channel-major activation.
        # Cross-image wraps (lane-batched layout) land exactly on masked border taps.
        taps = []
        k = 0
        for dy in (-1, 0, 1):
            for dx in (-1, 0, 1):
                s = dy * width + dx                             # flat spatial shift
                if s == 0:
                    taps.append(a)
                else:
                    rolled = pltpu.roll(a, shift=(-s) % lanes, axis=1)
                    taps.append(rolled * m_ref[k:k + 1, :])     # zero out-of-image taps
                k += 1
        return taps

    # Share the 9 rolls between branch_1's 3x3 and branch_2's first 3x3: roll the
    # 32 stem rows [16:48) once, slice each tap into the two im2col stacks.
    t12 = taps_of(stem[16:48, :])                               # 9 x (32, lanes)
    cat1 = jnp.concatenate([t[0:16, :] for t in t12], axis=0)   # (144, lanes) branch_1
    cat2 = jnp.concatenate([t[16:32, :] for t in t12], axis=0)  # (144, lanes) branch_2 #1
    x1 = jnp.maximum(mm(w11_ref, cat1), 0.0)                    # (16, lanes)
    u = jnp.maximum(mm(w21_ref, cat2), 0.0)                     # (24, lanes)

    cat3 = jnp.concatenate(taps_of(u), axis=0)                  # (216, lanes) branch_2 #2
    x2 = jnp.maximum(mm(w22_ref, cat3), 0.0)                    # (32, lanes)

    # Final 1x1 conv over concat([x0, x1, x2]) as a single K=64 matmul + bias.
    cat = jnp.concatenate([stem[0:16, :], x1, x2], axis=0)      # (64, lanes)
    res = mm(wf_ref, cat) + bf_ref[...]                         # (C, lanes) + (C, 1) lane-broadcast

    out = x_ref[...] + scale * res                              # re-read x here (short live range)
    if activation:
        out = jnp.maximum(out, 0.0)
    o_ref[...] = out.astype(o_ref.dtype)


def _tap_masks(H, W):
    """masks[k, h*W + w] = 1.0 iff spatial tap (dy, dx) stays inside the image (2D, no sublane pad)."""
    hw = H * W
    h = np.arange(hw) // W
    w = np.arange(hw) % W
    masks = np.zeros((9, hw), np.float32)
    k = 0
    for dy in (-1, 0, 1):
        for dx in (-1, 0, 1):
            valid = (h + dy >= 0) & (h + dy < H) & (w + dx >= 0) & (w + dx < W)
            masks[k, :] = valid.astype(np.float32)
            k += 1
    return masks


def _choose_images_per_block(N, C, hw):
    """Largest divisor B of N keeping >=2 grid steps (v7x megacore) under a conservative VMEM budget."""
    budget = 12 * 1024 * 1024          # conservative: fits v5e's 16 MiB / v7x's 32 MiB scoped default
    # f32 rows live per step: double-buffered in/out blocks + masks + stem/branch acts + im2col stacks.
    rows = 2 * 2 * C + 9 + 48 + 16 + 24 + 32 + 64 + 2 * 144 + 216
    best = 1
    for b in range(1, N + 1):
        if N % b:
            continue
        if N >= 2 and N // b < 2:
            continue                   # keep >= 2 parallel steps for v7x's 2 TensorCores
        if 4 * rows * b * hw <= budget:
            best = b
    return best


def inception_resnet_a_half(x_nchw, params, *, scale=1.0, activation=True,
                            images_per_block=None):
    N, C, H, W = x_nchw.shape
    hw = H * W

    if images_per_block is not None:
        B = images_per_block
    elif hw % 128 != 0:
        # TODO(synk): non-128-multiple spatial sizes fall back to one full-array block.
        B = N
    else:
        B = _choose_images_per_block(N, C, hw)
    assert N % B == 0
    G = N // B
    lanes = B * hw

    # (N, C, H, W) -> (C, N, HW) -> (C, N*HW): one XLA transpose, then a free trailing-dim merge.
    x2d = jnp.transpose(x_nchw.reshape(N, C, hw), (1, 0, 2)).reshape(C, N * hw)
    masks = jnp.asarray(np.tile(_tap_masks(H, W), (1, B)))     # (9, B*HW), tiled per image

    kernel = functools.partial(_fused_block_kernel, width=W,
                               scale=float(scale), activation=bool(activation))
    bf16 = jnp.bfloat16

    out2d = pl.pallas_call(
        kernel,
        out_shape=jax.ShapeDtypeStruct((C, N * hw), jnp.float32),
        grid_spec=pltpu.PrefetchScalarGridSpec(
            num_scalar_prefetch=0,
            grid=(G,),
            in_specs=[
                pl.BlockSpec((C, lanes), lambda g: (0, g)),     # x, B lane-batched images per step
                pl.BlockSpec((9, lanes), lambda g: (0, 0)),     # 3x3 border masks
                pl.BlockSpec((48, C), lambda g: (0, 0)),        # merged 1x1 stems (b0 | b1_0 | b2_0)
                pl.BlockSpec((16, 9 * 16), lambda g: (0, 0)),   # branch_1 3x3
                pl.BlockSpec((24, 9 * 16), lambda g: (0, 0)),   # branch_2 3x3 #1
                pl.BlockSpec((32, 9 * 24), lambda g: (0, 0)),   # branch_2 3x3 #2
                pl.BlockSpec((C, 64), lambda g: (0, 0)),        # final 1x1 conv
                pl.BlockSpec((C, 1), lambda g: (0, 0)),         # final bias (f32)
            ],
            out_specs=pl.BlockSpec((C, lanes), lambda g: (0, g)),
        ),
        compiler_params=pltpu.CompilerParams(
            dimension_semantics=("parallel",)),
    )(x2d, masks,
      params["w_stem"].astype(bf16), params["w_b1_1"].astype(bf16),
      params["w_b2_1"].astype(bf16), params["w_b2_2"].astype(bf16),
      params["w_final"].astype(bf16), params["b_final"])

    return jnp.transpose(out2d.reshape(C, N, hw), (1, 0, 2)).reshape(N, C, H, W)


# ----------------------------------------------------------------------------
# Parameter init (deterministic, synthetic) + BN folding into kernel layouts
# ----------------------------------------------------------------------------
def init_params(key, in_channels, dtype=jnp.float32):
    ks = jax.random.split(key, 8)
    raw = {
        "b0":   jax.random.normal(ks[0], (16, in_channels, 1, 1), dtype) * 0.1,
        "b1_0": jax.random.normal(ks[1], (16, in_channels, 1, 1), dtype) * 0.1,
        "b1_1": jax.random.normal(ks[2], (16, 16, 3, 3), dtype) * 0.1,
        "b2_0": jax.random.normal(ks[3], (16, in_channels, 1, 1), dtype) * 0.1,
        "b2_1": jax.random.normal(ks[4], (24, 16, 3, 3), dtype) * 0.1,
        "b2_2": jax.random.normal(ks[5], (32, 24, 3, 3), dtype) * 0.1,
        "conv_w": jax.random.normal(ks[6], (in_channels, 64, 1, 1), dtype) * 0.1,
        "conv_b": jax.random.normal(ks[7], (in_channels,), dtype) * 0.1,
    }

    def fold1x1(w_oihw):                    # -> (Cout, Cin), BN folded
        return w_oihw[:, :, 0, 0] * _BN_SCALE

    def fold3x3(w_oihw):                    # -> (Cout, 9*Cin), tap (ky,kx) row-major, cin minor
        cout, cin = w_oihw.shape[0], w_oihw.shape[1]
        return jnp.transpose(w_oihw, (0, 2, 3, 1)).reshape(cout, 9 * cin) * _BN_SCALE

    params = {
        "w_stem": jnp.concatenate(
            [fold1x1(raw["b0"]), fold1x1(raw["b1_0"]), fold1x1(raw["b2_0"])], axis=0),  # (48, C)
        "w_b1_1": fold3x3(raw["b1_1"]),                    # (16, 144)
        "w_b2_1": fold3x3(raw["b2_1"]),                    # (24, 144)
        "w_b2_2": fold3x3(raw["b2_2"]),                    # (32, 216)
        "w_final": raw["conv_w"][:, :, 0, 0],              # (C, 64)
        "b_final": raw["conv_b"].reshape(in_channels, 1),  # (C, 1)
    }
    return params, raw


# ----------------------------------------------------------------------------
# Pure-JAX reference (NCHW, HIGHEST precision)
# ----------------------------------------------------------------------------
def reference_forward(x_nchw, raw, *, scale=1.0, activation=True):
    def conv(a, w_oihw, pad):
        return lax.conv_general_dilated(
            a, w_oihw, (1, 1), [(pad, pad), (pad, pad)],
            dimension_numbers=("NCHW", "OIHW", "NCHW"),
            precision=lax.Precision.HIGHEST)

    def block(a, w, pad):
        return jax.nn.relu(conv(a, w, pad) * _BN_SCALE)

    x0 = block(x_nchw, raw["b0"], 0)
    x1 = block(block(x_nchw, raw["b1_0"], 0), raw["b1_1"], 1)
    x2 = block(block(block(x_nchw, raw["b2_0"], 0), raw["b2_1"], 1), raw["b2_2"], 1)
    xr = jnp.concatenate([x0, x1, x2], axis=1)
    xr = conv(xr, raw["conv_w"], 0) + raw["conv_b"].reshape(1, -1, 1, 1)
    out = x_nchw + scale * xr
    if activation:
        out = jax.nn.relu(out)
    return out


# ----------------------------------------------------------------------------
if __name__ == "__main__":
    N, C, H, W = 2, 8, 16, 16       # small NCHW input consistent with the module
    scale, activation = 0.17, True

    key = jax.random.PRNGKey(0)
    kx, kp = jax.random.split(key)
    x = jax.random.normal(kx, (N, C, H, W), jnp.float32)
    params, raw = init_params(kp, C)

    out = inception_resnet_a_half(x, params, scale=scale, activation=activation)
    out = jax.block_until_ready(out)
    assert out.shape == (N, C, H, W) and out.dtype == jnp.float32

    ref = jax.block_until_ready(reference_forward(x, raw, scale=scale, activation=activation))
    max_err = float(jnp.max(jnp.abs(out - ref)))
    # Kernel matmuls run a single bf16 MXU pass (f32 accumulation); residual path stays exact f32.
    assert max_err < 5e-3, f"mismatch vs reference: max_err={max_err}"

    print("KERNEL_OK")
</pallas_src>

<mosaic_0001>
module attributes {stable_mosaic.version = 11 : i64} {
  func.func @_fused_block_kernel(%arg0: i32, %arg1: memref<8x256xf32, #tpu.memory_space<vmem>>, %arg2: memref<9x256xf32, #tpu.memory_space<vmem>>, %arg3: memref<48x8xbf16, #tpu.memory_space<vmem>>, %arg4: memref<16x144xbf16, #tpu.memory_space<vmem>>, %arg5: memref<24x144xbf16, #tpu.memory_space<vmem>>, %arg6: memref<32x216xbf16, #tpu.memory_space<vmem>>, %arg7: memref<8x64xbf16, #tpu.memory_space<vmem>>, %arg8: memref<8x1xf32, #tpu.memory_space<vmem>>, %arg9: memref<8x256xf32, #tpu.memory_space<vmem>>) attributes {dimension_semantics = [#tpu.dimension_semantics<parallel>], iteration_bounds = array<i64: 2>, scalar_prefetch = 0 : i64, scratch_operands = 0 : i64, tpu.core_type = #tpu.core_type<tc>, window_params = [{transform_indices = @transform_0, window_bounds = array<i64: 8, 256>}, {pipeline_mode = #tpu.pipeline_mode<synchronous>, transform_indices = @transform_1, window_bounds = array<i64: 9, 256>}, {pipeline_mode = #tpu.pipeline_mode<synchronous>, transform_indices = @transform_2, window_bounds = array<i64: 48, 8>}, {pipeline_mode = #tpu.pipeline_mode<synchronous>, transform_indices = @transform_3, window_bounds = array<i64: 16, 144>}, {pipeline_mode = #tpu.pipeline_mode<synchronous>, transform_indices = @transform_4, window_bounds = array<i64: 24, 144>}, {pipeline_mode = #tpu.pipeline_mode<synchronous>, transform_indices = @transform_5, window_bounds = array<i64: 32, 216>}, {pipeline_mode = #tpu.pipeline_mode<synchronous>, transform_indices = @transform_6, window_bounds = array<i64: 8, 64>}, {pipeline_mode = #tpu.pipeline_mode<synchronous>, transform_indices = @transform_7, window_bounds = array<i64: 8, 1>}, {transform_indices = @transform_8, window_bounds = array<i64: 8, 256>}]} {
    %c0 = arith.constant 0 : index
    %c0_0 = arith.constant 0 : index
    %0 = vector.load %arg1[%c0, %c0_0] : memref<8x256xf32, #tpu.memory_space<vmem>>, vector<8x256xf32>
    %c0_1 = arith.constant 0 : index
    %c0_2 = arith.constant 0 : index
    %1 = vector.load %arg3[%c0_1, %c0_2] : memref<48x8xbf16, #tpu.memory_space<vmem>>, vector<48x8xbf16>
    %2 = arith.truncf %0 : vector<8x256xf32> to vector<8x256xbf16>
    %cst = arith.constant dense<0.000000e+00> : vector<48x256xf32>
    %3 = tpu.matmul %1, %2, %cst {dimension_numbers = #tpu.dot_dimension_numbers<[1], [0], [0], [1], [0, 0, 1, 1], [], []>} : vector<48x8xbf16>, vector<8x256xbf16>, vector<48x256xf32> -> vector<48x256xf32>
    %cst_3 = arith.constant 0.000000e+00 : f32
    %4 = vector.broadcast %cst_3 : f32 to vector<48x256xf32>
    %5 = arith.maximumf %3, %4 : vector<48x256xf32>
    %6 = vector.extract_strided_slice %5 {offsets = [16, 0], sizes = [32, 256], strides = [1, 1]} : vector<48x256xf32> to vector<32x256xf32>
    %c17_i32 = arith.constant 17 : i32
    %7 = tpu.dynamic_rotate %6 by %c17_i32 dim 1 : vector<32x256xf32>, i32 -> vector<32x256xf32>
    %c0_4 = arith.constant 0 : index
    %c0_5 = arith.constant 0 : index
    %8 = vector.load %arg2[%c0_4, %c0_5] : memref<9x256xf32, #tpu.memory_space<vmem>>, vector<1x256xf32>
    %9 = vector.broadcast %8 : vector<1x256xf32> to vector<32x256xf32>
    %10 = arith.mulf %7, %9 : vector<32x256xf32>
    %c16_i32 = arith.constant 16 : i32
    %11 = tpu.dynamic_rotate %6 by %c16_i32 dim 1 : vector<32x256xf32>, i32 -> vector<32x256xf32>
    %c1 = arith.constant 1 : index
    %c0_6 = arith.constant 0 : index
    %12 = vector.load %arg2[%c1, %c0_6] : memref<9x256xf32, #tpu.memory_space<vmem>>, vector<1x256xf32>
    %13 = vector.broadcast %12 : vector<1x256xf32> to vector<32x256xf32>
    %14 = arith.mulf %11, %13 : vector<32x256xf32>
    %c15_i32 = arith.constant 15 : i32
    %15 = tpu.dynamic_rotate %6 by %c15_i32 dim 1 : vector<32x256xf32>, i32 -> vector<32x256xf32>
    %c2 = arith.constant 2 : index
    %c0_7 = arith.constant 0 : index
    %16 = vector.load %arg2[%c2, %c0_7] : memref<9x256xf32, #tpu.memory_space<vmem>>, vector<1x256xf32>
    %17 = vector.broadcast %16 : vector<1x256xf32> to vector<32x256xf32>
    %18 = arith.mulf %15, %17 : vector<32x256xf32>
    %c1_i32 = arith.constant 1 : i32
    %19 = tpu.dynamic_rotate %6 by %c1_i32 dim 1 : vector<32x256xf32>, i32 -> vector<32x256xf32>
    %c3 = arith.constant 3 : index
    %c0_8 = arith.constant 0 : index
    %20 = vector.load %arg2[%c3, %c0_8] : memref<9x256xf32, #tpu.memory_space<vmem>>, vector<1x256xf32>
    %21 = vector.broadcast %20 : vector<1x256xf32> to vector<32x256xf32>
    %22 = arith.mulf %19, %21 : vector<32x256xf32>
    %c255_i32 = arith.constant 255 : i32
    %23 = tpu.dynamic_rotate %6 by %c255_i32 dim 1 : vector<32x256xf32>, i32 -> vector<32x256xf32>
    %c5 = arith.constant 5 : index
    %c0_9 = arith.constant 0 : index
    %24 = vector.load %arg2[%c5, %c0_9] : memref<9x256xf32, #tpu.memory_space<vmem>>, vector<1x256xf32>
    %25 = vector.broadcast %24 : vector<1x256xf32> to vector<32x256xf32>
    %26 = arith.mulf %23, %25 : vector<32x256xf32>
    %c241_i32 = arith.constant 241 : i32
    %27 = tpu.dynamic_rotate %6 by %c241_i32 dim 1 : vector<32x256xf32>, i32 -> vector<32x256xf32>
    %c6 = arith.constant 6 : index
    %c0_10 = arith.constant 0 : index
    %28 = vector.load %arg2[%c6, %c0_10] : memref<9x256xf32, #tpu.memory_space<vmem>>, vector<1x256xf32>
    %29 = vector.broadcast %28 : vector<1x256xf32> to vector<32x256xf32>
    %30 = arith.mulf %27, %29 : vector<32x256xf32>
    %c240_i32 = arith.constant 240 : i32
    %31 = tpu.dynamic_rotate %6 by %c240_i32 dim 1 : vector<32x256xf32>, i32 -> vector<32x256xf32>
    %c7 = arith.constant 7 : index
    %c0_11 = arith.constant 0 : index
    %32 = vector.load %arg2[%c7, %c0_11] : memref<9x256xf32, #tpu.memory_space<vmem>>, vector<1x256xf32>
    %33 = vector.broadcast %32 : vector<1x256xf32> to vector<32x256xf32>
    %34 = arith.mulf %31, %33 : vector<32x256xf32>
    %c239_i32 = arith.constant 239 : i32
    %35 = tpu.dynamic_rotate %6 by %c239_i32 dim 1 : vector<32x256xf32>, i32 -> vector<32x256xf32>
    %c8 = arith.constant 8 : index
    %c0_12 = arith.constant 0 : index
    %36 = vector.load %arg2[%c8, %c0_12] : memref<9x256xf32, #tpu.memory_space<vmem>>, vector<1x256xf32>
    %37 = vector.broadcast %36 : vector<1x256xf32> to vector<32x256xf32>
    %38 = arith.mulf %35, %37 : vector<32x256xf32>
    %39 = vector.extract_strided_slice %10 {offsets = [0, 0], sizes = [16, 256], strides = [1, 1]} : vector<32x256xf32> to vector<16x256xf32>
    %40 = vector.extract_strided_slice %14 {offsets = [0, 0], sizes = [16, 256], strides = [1, 1]} : vector<32x256xf32> to vector<16x256xf32>
    %41 = vector.extract_strided_slice %18 {offsets = [0, 0], sizes = [16, 256], strides = [1, 1]} : vector<32x256xf32> to vector<16x256xf32>
    %42 = vector.extract_strided_slice %22 {offsets = [0, 0], sizes = [16, 256], strides = [1, 1]} : vector<32x256xf32> to vector<16x256xf32>
    %43 = vector.extract_strided_slice %6 {offsets = [0, 0], sizes = [16, 256], strides = [1, 1]} : vector<32x256xf32> to vector<16x256xf32>
    %44 = vector.extract_strided_slice %26 {offsets = [0, 0], sizes = [16, 256], strides = [1, 1]} : vector<32x256xf32> to vector<16x256xf32>
    %45 = vector.extract_strided_slice %30 {offsets = [0, 0], sizes = [16, 256], strides = [1, 1]} : vector<32x256xf32> to vector<16x256xf32>
    %46 = vector.extract_strided_slice %34 {offsets = [0, 0], sizes = [16, 256], strides = [1, 1]} : vector<32x256xf32> to vector<16x256xf32>
    %47 = vector.extract_strided_slice %38 {offsets = [0, 0], sizes = [16, 256], strides = [1, 1]} : vector<32x256xf32> to vector<16x256xf32>
    %48 = tpu.concatenate %39, %40, %41, %42, %43, %44, %45, %46, %47 in 0 : vector<16x256xf32>, vector<16x256xf32>, vector<16x256xf32>, vector<16x256xf32>, vector<16x256xf32>, vector<16x256xf32>, vector<16x256xf32>, vector<16x256xf32>, vector<16x256xf32> -> vector<144x256xf32>
    %49 = vector.extract_strided_slice %10 {offsets = [16, 0], sizes = [16, 256], strides = [1, 1]} : vector<32x256xf32> to vector<16x256xf32>
    %50 = vector.extract_strided_slice %14 {offsets = [16, 0], sizes = [16, 256], strides = [1, 1]} : vector<32x256xf32> to vector<16x256xf32>
    %51 = vector.extract_strided_slice %18 {offsets = [16, 0], sizes = [16, 256], strides = [1, 1]} : vector<32x256xf32> to vector<16x256xf32>
    %52 = vector.extract_strided_slice %22 {offsets = [16, 0], sizes = [16, 256], strides = [1, 1]} : vector<32x256xf32> to vector<16x256xf32>
    %53 = vector.extract_strided_slice %6 {offsets = [16, 0], sizes = [16, 256], strides = [1, 1]} : vector<32x256xf32> to vector<16x256xf32>
    %54 = vector.extract_strided_slice %26 {offsets = [16, 0], sizes = [16, 256], strides = [1, 1]} : vector<32x256xf32> to vector<16x256xf32>
    %55 = vector.extract_strided_slice %30 {offsets = [16, 0], sizes = [16, 256], strides = [1, 1]} : vector<32x256xf32> to vector<16x256xf32>
    %56 = vector.extract_strided_slice %34 {offsets = [16, 0], sizes = [16, 256], strides = [1, 1]} : vector<32x256xf32> to vector<16x256xf32>
    %57 = vector.extract_strided_slice %38 {offsets = [16, 0], sizes = [16, 256], strides = [1, 1]} : vector<32x256xf32> to vector<16x256xf32>
    %58 = tpu.concatenate %49, %50, %51, %52, %53, %54, %55, %56, %57 in 0 : vector<16x256xf32>, vector<16x256xf32>, vector<16x256xf32>, vector<16x256xf32>, vector<16x256xf32>, vector<16x256xf32>, vector<16x256xf32>, vector<16x256xf32>, vector<16x256xf32> -> vector<144x256xf32>
    %c0_13 = arith.constant 0 : index
    %c0_14 = arith.constant 0 : index
    %59 = vector.load %arg4[%c0_13, %c0_14] : memref<16x144xbf16, #tpu.memory_space<vmem>>, vector<16x144xbf16>
    %60 = arith.truncf %48 : vector<144x256xf32> to vector<144x256xbf16>
    %cst_15 = arith.constant dense<0.000000e+00> : vector<16x256xf32>
    %61 = tpu.matmul %59, %60, %cst_15 {dimension_numbers = #tpu.dot_dimension_numbers<[1], [0], [0], [1], [0, 0, 1, 1], [], []>} : vector<16x144xbf16>, vector<144x256xbf16>, vector<16x256xf32> -> vector<16x256xf32>
    %cst_16 = arith.constant 0.000000e+00 : f32
    %62 = vector.broadcast %cst_16 : f32 to vector<16x256xf32>
    %63 = arith.maximumf %61, %62 : vector<16x256xf32>
    %c0_17 = arith.constant 0 : index
    %c0_18 = arith.constant 0 : index
    %64 = vector.load %arg5[%c0_17, %c0_18] : memref<24x144xbf16, #tpu.memory_space<vmem>>, vector<24x144xbf16>
    %65 = arith.truncf %58 : vector<144x256xf32> to vector<144x256xbf16>
    %cst_19 = arith.constant dense<0.000000e+00> : vector<24x256xf32>
    %66 = tpu.matmul %64, %65, %cst_19 {dimension_numbers = #tpu.dot_dimension_numbers<[1], [0], [0], [1], [0, 0, 1, 1], [], []>} : vector<24x144xbf16>, vector<144x256xbf16>, vector<24x256xf32> -> vector<24x256xf32>
    %cst_20 = arith.constant 0.000000e+00 : f32
    %67 = vector.broadcast %cst_20 : f32 to vector<24x256xf32>
    %68 = arith.maximumf %66, %67 : vector<24x256xf32>
    %c17_i32_21 = arith.constant 17 : i32
    %69 = tpu.dynamic_rotate %68 by %c17_i32_21 dim 1 : vector<24x256xf32>, i32 -> vector<24x256xf32>
    %c0_22 = arith.constant 0 : index
    %c0_23 = arith.constant 0 : index
    %70 = vector.load %arg2[%c0_22, %c0_23] : memref<9x256xf32, #tpu.memory_space<vmem>>, vector<1x256xf32>
    %71 = vector.broadcast %70 : vector<1x256xf32> to vector<24x256xf32>
    %72 = arith.mulf %69, %71 : vector<24x256xf32>
    %c16_i32_24 = arith.constant 16 : i32
    %73 = tpu.dynamic_rotate %68 by %c16_i32_24 dim 1 : vector<24x256xf32>, i32 -> vector<24x256xf32>
    %c1_25 = arith.constant 1 : index
    %c0_26 = arith.constant 0 : index
    %74 = vector.load %arg2[%c1_25, %c0_26] : memref<9x256xf32, #tpu.memory_space<vmem>>, vector<1x256xf32>
    %75 = vector.broadcast %74 : vector<1x256xf32> to vector<24x256xf32>
    %76 = arith.mulf %73, %75 : vector<24x256xf32>
    %c15_i32_27 = arith.constant 15 : i32
    %77 = tpu.dynamic_rotate %68 by %c15_i32_27 dim 1 : vector<24x256xf32>, i32 -> vector<24x256xf32>
    %c2_28 = arith.constant 2 : index
    %c0_29 = arith.constant 0 : index
    %78 = vector.load %arg2[%c2_28, %c0_29] : memref<9x256xf32, #tpu.memory_space<vmem>>, vector<1x256xf32>
    %79 = vector.broadcast %78 : vector<1x256xf32> to vector<24x256xf32>
    %80 = arith.mulf %77, %79 : vector<24x256xf32>
    %c1_i32_30 = arith.constant 1 : i32
    %81 = tpu.dynamic_rotate %68 by %c1_i32_30 dim 1 : vector<24x256xf32>, i32 -> vector<24x256xf32>
    %c3_31 = arith.constant 3 : index
    %c0_32 = arith.constant 0 : index
    %82 = vector.load %arg2[%c3_31, %c0_32] : memref<9x256xf32, #tpu.memory_space<vmem>>, vector<1x256xf32>
    %83 = vector.broadcast %82 : vector<1x256xf32> to vector<24x256xf32>
    %84 = arith.mulf %81, %83 : vector<24x256xf32>
    %c255_i32_33 = arith.constant 255 : i32
    %85 = tpu.dynamic_rotate %68 by %c255_i32_33 dim 1 : vector<24x256xf32>, i32 -> vector<24x256xf32>
    %c5_34 = arith.constant 5 : index
    %c0_35 = arith.constant 0 : index
    %86 = vector.load %arg2[%c5_34, %c0_35] : memref<9x256xf32, #tpu.memory_space<vmem>>, vector<1x256xf32>
    %87 = vector.broadcast %86 : vector<1x256xf32> to vector<24x256xf32>
    %88 = arith.mulf %85, %87 : vector<24x256xf32>
    %c241_i32_36 = arith.constant 241 : i32
    %89 = tpu.dynamic_rotate %68 by %c241_i32_36 dim 1 : vector<24x256xf32>, i32 -> vector<24x256xf32>
    %c6_37 = arith.constant 6 : index
    %c0_38 = arith.constant 0 : index
    %90 = vector.load %arg2[%c6_37, %c0_38] : memref<9x256xf32, #tpu.memory_space<vmem>>, vector<1x256xf32>
    %91 = vector.broadcast %90 : vector<1x256xf32> to vector<24x256xf32>
    %92 = arith.mulf %89, %91 : vector<24x256xf32>
    %c240_i32_39 = arith.constant 240 : i32
    %93 = tpu.dynamic_rotate %68 by %c240_i32_39 dim 1 : vector<24x256xf32>, i32 -> vector<24x256xf32>
    %c7_40 = arith.constant 7 : index
    %c0_41 = arith.constant 0 : index
    %94 = vector.load %arg2[%c7_40, %c0_41] : memref<9x256xf32, #tpu.memory_space<vmem>>, vector<1x256xf32>
    %95 = vector.broadcast %94 : vector<1x256xf32> to vector<24x256xf32>
    %96 = arith.mulf %93, %95 : vector<24x256xf32>
    %c239_i32_42 = arith.constant 239 : i32
    %97 = tpu.dynamic_rotate %68 by %c239_i32_42 dim 1 : vector<24x256xf32>, i32 -> vector<24x256xf32>
    %c8_43 = arith.constant 8 : index
    %c0_44 = arith.constant 0 : index
    %98 = vector.load %arg2[%c8_43, %c0_44] : memref<9x256xf32, #tpu.memory_space<vmem>>, vector<1x256xf32>
    %99 = vector.broadcast %98 : vector<1x256xf32> to vector<24x256xf32>
    %100 = arith.mulf %97, %99 : vector<24x256xf32>
    %101 = tpu.concatenate %72, %76, %80, %84, %68, %88, %92, %96, %100 in 0 : vector<24x256xf32>, vector<24x256xf32>, vector<24x256xf32>, vector<24x256xf32>, vector<24x256xf32>, vector<24x256xf32>, vector<24x256xf32>, vector<24x256xf32>, vector<24x256xf32> -> vector<216x256xf32>
    %c0_45 = arith.constant 0 : index
    %c0_46 = arith.constant 0 : index
    %102 = vector.load %arg6[%c0_45, %c0_46] : memref<32x216xbf16, #tpu.memory_space<vmem>>, vector<32x216xbf16>
    %103 = arith.truncf %101 : vector<216x256xf32> to vector<216x256xbf16>
    %cst_47 = arith.constant dense<0.000000e+00> : vector<32x256xf32>
    %104 = tpu.matmul %102, %103, %cst_47 {dimension_numbers = #tpu.dot_dimension_numbers<[1], [0], [0], [1], [0, 0, 1, 1], [], []>} : vector<32x216xbf16>, vector<216x256xbf16>, vector<32x256xf32> -> vector<32x256xf32>
    %cst_48 = arith.constant 0.000000e+00 : f32
    %105 = vector.broadcast %cst_48 : f32 to vector<32x256xf32>
    %106 = arith.maximumf %104, %105 : vector<32x256xf32>
    %107 = vector.extract_strided_slice %5 {offsets = [0, 0], sizes = [16, 256], strides = [1, 1]} : vector<48x256xf32> to vector<16x256xf32>
    %108 = tpu.concatenate %107, %63, %106 in 0 : vector<16x256xf32>, vector<16x256xf32>, vector<32x256xf32> -> vector<64x256xf32>
    %c0_49 = arith.constant 0 : index
    %c0_50 = arith.constant 0 : index
    %109 = vector.load %arg7[%c0_49, %c0_50] : memref<8x64xbf16, #tpu.memory_space<vmem>>, vector<8x64xbf16>
    %110 = arith.truncf %108 : vector<64x256xf32> to vector<64x256xbf16>
    %cst_51 = arith.constant dense<0.000000e+00> : vector<8x256xf32>
    %111 = tpu.matmul %109, %110, %cst_51 {dimension_numbers = #tpu.dot_dimension_numbers<[1], [0], [0], [1], [0, 0, 1, 1], [], []>} : vector<8x64xbf16>, vector<64x256xbf16>, vector<8x256xf32> -> vector<8x256xf32>
    %c0_52 = arith.constant 0 : index
    %c0_53 = arith.constant 0 : index
    %112 = vector.load %arg8[%c0_52, %c0_53] : memref<8x1xf32, #tpu.memory_space<vmem>>, vector<8x1xf32>
    %113 = vector.broadcast %112 : vector<8x1xf32> to vector<8x256xf32>
    %114 = arith.addf %111, %113 : vector<8x256xf32>
    %c0_54 = arith.constant 0 : index
    %c0_55 = arith.constant 0 : index
    %115 = vector.load %arg1[%c0_54, %c0_55] : memref<8x256xf32, #tpu.memory_space<vmem>>, vector<8x256xf32>
    %cst_56 = arith.constant 1.700000e-01 : f32
    %116 = vector.broadcast %cst_56 : f32 to vector<8x256xf32>
    %117 = arith.mulf %116, %114 : vector<8x256xf32>
    %118 = arith.addf %115, %117 : vector<8x256xf32>
    %cst_57 = arith.constant 0.000000e+00 : f32
    %119 = vector.broadcast %cst_57 : f32 to vector<8x256xf32>
    %120 = arith.maximumf %118, %119 : vector<8x256xf32>
    %c0_58 = arith.constant 0 : index
    %c0_59 = arith.constant 0 : index
    %121 = vector.load %arg9[%c0_58, %c0_59] : memref<8x256xf32, #tpu.memory_space<vmem>>, vector<8x256xf32>
    tpu.vector_store %arg9[%c0_58, %c0_59], %120 {strides = array<i32>} : memref<8x256xf32, #tpu.memory_space<vmem>>, vector<8x256xf32>,
    return
  }
  func.func @transform_0(%arg0: i32) -> (i32, i32) {
    %c0_i32 = arith.constant 0 : i32
    %c0_i32_0 = arith.constant 0 : i32
    return %c0_i32, %arg0 : i32, i32
  }
  func.func @transform_1(%arg0: i32) -> (i32, i32) {
    %c0_i32 = arith.constant 0 : i32
    %c0_i32_0 = arith.constant 0 : i32
    %c0_i32_1 = arith.constant 0 : i32
    return %c0_i32, %c0_i32_0 : i32, i32
  }
  func.func @transform_2(%arg0: i32) -> (i32, i32) {
    %c0_i32 = arith.constant 0 : i32
    %c0_i32_0 = arith.constant 0 : i32
    %c0_i32_1 = arith.constant 0 : i32
    return %c0_i32, %c0_i32_0 : i32, i32
  }
  func.func @transform_3(%arg0: i32) -> (i32, i32) {
    %c0_i32 = arith.constant 0 : i32
    %c0_i32_0 = arith.constant 0 : i32
    %c0_i32_1 = arith.constant 0 : i32
    return %c0_i32, %c0_i32_0 : i32, i32
  }
  func.func @transform_4(%arg0: i32) -> (i32, i32) {
    %c0_i32 = arith.constant 0 : i32
    %c0_i32_0 = arith.constant 0 : i32
    %c0_i32_1 = arith.constant 0 : i32
    return %c0_i32, %c0_i32_0 : i32, i32
  }
  func.func @transform_5(%arg0: i32) -> (i32, i32) {
    %c0_i32 = arith.constant 0 : i32
    %c0_i32_0 = arith.constant 0 : i32
    %c0_i32_1 = arith.constant 0 : i32
    return %c0_i32, %c0_i32_0 : i32, i32
  }
  func.func @transform_6(%arg0: i32) -> (i32, i32) {
    %c0_i32 = arith.constant 0 : i32
    %c0_i32_0 = arith.constant 0 : i32
    %c0_i32_1 = arith.constant 0 : i32
    return %c0_i32, %c0_i32_0 : i32, i32
  }
  func.func @transform_7(%arg0: i32) -> (i32, i32) {
    %c0_i32 = arith.constant 0 : i32
    %c0_i32_0 = arith.constant 0 : i32
    %c0_i32_1 = arith.constant 0 : i32
    return %c0_i32, %c0_i32_0 : i32, i32
  }
  func.func @transform_8(%arg0: i32) -> (i32, i32) {
    %c0_i32 = arith.constant 0 : i32
    %c0_i32_0 = arith.constant 0 : i32
    return %c0_i32, %arg0 : i32, i32
  }
}

</mosaic_0001>

<llo_original>
// kernel: tpu_custom_call.1
$region0: #{tpu_custom_call.1}
  #allocation0 [shape = 'u32[]', space=smem, size = 0x4, offset = 0x4, fixed_abs, tag = 'smem constant byte address 0x4 - core index']
  #allocation1 [shape = 'u32[144,128]{1,0:T(1,128)}', space=vmem, size = 0x12000, scoped, tag = 'internal scratch']
  %s0 = inlined_call_operand.vmem [shape: f32[8,512], index: 0, kind: input, shape index: {}]
  %s1 = inlined_call_operand.hbm [shape: f32[9,256], index: 1, kind: input, shape index: {}]
  %s2 = inlined_call_operand.vmem [shape: bf16[48,8], index: 2, kind: input, shape index: {}]
  %s3 = inlined_call_operand.vmem [shape: bf16[16,144], index: 3, kind: input, shape index: {}]
  %s4 = inlined_call_operand.hbm [shape: bf16[24,144], index: 4, kind: input, shape index: {}]
  %s5 = inlined_call_operand.hbm [shape: bf16[32,216], index: 5, kind: input, shape index: {}]
  %s6 = inlined_call_operand.vmem [shape: bf16[8,64], index: 6, kind: input, shape index: {}]
  %s7 = inlined_call_operand.vmem [shape: f32[8,1], index: 7, kind: input, shape index: {}]
  %s8 = inlined_call_operand.hbm [shape: f32[8,512], index: 8, kind: output, shape index: {}]
  %s9 = sld [smem:[#allocation0]]
  $region77: #{tpu_custom_call.1} parent=0
    _
  %s11 = ssub.s32 1, %s9
  %s12 = scalar_select 0, %s11, %s9
  $region1: #{tpu_custom_call.1} parent=0
    #allocation2 [shape = 'u8[16384]{0}', space=vmem, size = 0x4000, scoped, tag = 'input window, operand 1, single buffered']
    #allocation3 [shape = 's32[2]{0}', space=sflag, size = 0x8, scoped, tag = 'scoped memory for tpu_custom_call.1']
    #allocation4 [shape = 's32[2]{0}', space=sflag, size = 0x8, scoped, tag = 'scoped memory for tpu_custom_call.1']
    #allocation5 [shape = 'u8[12288]{0}', space=vmem, size = 0x3000, scoped, tag = 'input window, operand 4, single buffered']
    #allocation6 [shape = 's32[1]{0}', space=sflag, size = 0x4, scoped, tag = 'scoped memory for tpu_custom_call.1']
    #allocation7 [shape = 'u8[16384]{0}', space=vmem, size = 0x4000, scoped, tag = 'input window, operand 5, single buffered']
    #allocation8 [shape = 'u8[16384]{0}', space=vmem, size = 0x4000, scoped, tag = 'output window, operand 0']
    %13 = vsyncpa [#allocation3], 0
    %14 = vsyncpa [#allocation6], 0
    %15 = vsyncpa [#allocation4], 0
    %s16 = scalar_lea.sflag [#allocation4], 1
    %17 = vsyncpa %s16, 0
    loop: start=0, step=1, limit=4
    $region2: #{tpu_custom_call.1} parent=1 // loop_pre_header
      _
    $region3: #{tpu_custom_call.1} parent=1 // loop_header
      %s19 = sphi 0, %s23
      %p20 = scmp.ge.s32.totalorder %s19, 4
      %s29 = sphi 0, %s31
      %s32 = sphi 0, %s29
      %s33 = sphi 0, %s32
      %s49 = sphi 0, %s33
      %s53 = sphi 0, %s53
      %s55 = sphi 0, %s53
      %s56 = sphi 0, %s55
      %s70 = sphi 0, %s56
      %s74 = sphi 0, %s74
      %s76 = sphi 0, %s74
      %s77 = sphi 0, %s76
      %s91 = sphi 0, %s77
      %s95 = sphi 0, %s95
      %s97 = sphi 0, %s95
      %s98 = sphi 0, %s97
      %s112 = sphi 0, %s98
      %s116 = sphi 0, %s116
      %s118 = sphi 0, %s116
      %s119 = sphi 0, %s118
      %s133 = sphi 0, %s119
      %s137 = sphi 0, %s137
      %s139 = sphi 0, %s137
      %s140 = sphi 0, %s139
      %s154 = sphi 0, %s140
      %s158 = sphi 0, %s158
      %s160 = sphi 0, %s158
      %s161 = sphi 0, %s160
      %s175 = sphi 0, %s161
      %s179 = sphi 0, %s179
      %s181 = sphi 0, %s179
      %s182 = sphi 0, %s181
      %s196 = sphi 0, %s182
      %s202 = sphi 0, %s204
      %s205 = sphi 0, %s202
      %s206 = sphi 0, %s205
      %s222 = sphi 0, %s206
    $region4: #{tpu_custom_call.1} parent=1 // loop_header_branch
      %22 = sbr.rel (%p20) target = $region8
    $region5: #{tpu_custom_call.1} parent=1 // loop_body
      %s24 = ssub.s32 %s19, 1
      %s25 = ssub.s32 %s19, 2
      %s26 = sadd.s32 %s19, 1
      %s27 = ssub.s32 %s19, %s26
      %p28 = scmp.eq.s32.totalorder %s27, 0
      %s30 = sadd.s32 %s29, 1
      %s31 = scalar_select %p28, %s29, %s30
      %p34 = pneg %p28
      %p35 = scmp.eq.s32.totalorder %s19, 1
      %p36 = por %p34, %p35
      %p37 = scmp.ne.s32.totalorder %s29, %s32
      %p38 = scmp.eq.s32.totalorder %s19, 0
      %p39 = por %p37, %p38
      %p40 = scmp.ne.s32.totalorder %s29, %s32
      %p41 = scmp.eq.s32.totalorder %s24, 1
      %p42 = por %p40, %p41
      %p43 = scmp.ne.s32.totalorder %s32, %s33
      %p44 = scmp.eq.s32.totalorder %s24, 0
      %p45 = por %p43, %p44
      %p46 = scmp.ne.s32.totalorder %s32, %s33
      %p47 = scmp.eq.s32.totalorder %s25, 1
      %p48 = por %p46, %p47
      %p50 = scmp.ne.s32.totalorder %s33, %s49
      %p51 = scmp.eq.s32.totalorder %s25, 0
      %p52 = por %p50, %p51
      %s54 = sadd.s32 %s53, 1
      %p57 = scmp.eq.s32.totalorder %s19, 1
      %p58 = scmp.ne.s32.totalorder %s53, %s55
      %p59 = scmp.eq.s32.totalorder %s19, 0
      %p60 = por %p58, %p59
      %p61 = scmp.ne.s32.totalorder %s53, %s55
      %p62 = scmp.eq.s32.totalorder %s24, 1
      %p63 = por %p61, %p62
      %p64 = scmp.ne.s32.totalorder %s55, %s56
      %p65 = scmp.eq.s32.totalorder %s24, 0
      %p66 = por %p64, %p65
      %p67 = scmp.ne.s32.totalorder %s55, %s56
      %p68 = scmp.eq.s32.totalorder %s25, 1
      %p69 = por %p67, %p68
      %p71 = scmp.ne.s32.totalorder %s56, %s70
      %p72 = scmp.eq.s32.totalorder %s25, 0
      %p73 = por %p71, %p72
      %s75 = sadd.s32 %s74, 1
      %p78 = scmp.eq.s32.totalorder %s19, 1
      %p79 = scmp.ne.s32.totalorder %s74, %s76
      %p80 = scmp.eq.s32.totalorder %s19, 0
      %p81 = por %p79, %p80
      %p82 = scmp.ne.s32.totalorder %s74, %s76
      %p83 = scmp.eq.s32.totalorder %s24, 1
      %p84 = por %p82, %p83
      %p85 = scmp.ne.s32.totalorder %s76, %s77
      %p86 = scmp.eq.s32.totalorder %s24, 0
      %p87 = por %p85, %p86
      %p88 = scmp.ne.s32.totalorder %s76, %s77
      %p89 = scmp.eq.s32.totalorder %s25, 1
      %p90 = por %p88, %p89
      %p92 = scmp.ne.s32.totalorder %s77, %s91
      %p93 = scmp.eq.s32.totalorder %s25, 0
      %p94 = por %p92, %p93
      %s96 = sadd.s32 %s95, 1
      %p99 = scmp.eq.s32.totalorder %s19, 1
      %p100 = scmp.ne.s32.totalorder %s95, %s97
      %p101 = scmp.eq.s32.totalorder %s19, 0
      %p102 = por %p100, %p101
      %p103 = scmp.ne.s32.totalorder %s95, %s97
      %p104 = scmp.eq.s32.totalorder %s24, 1
      %p105 = por %p103, %p104
      %p106 = scmp.ne.s32.totalorder %s97, %s98
      %p107 = scmp.eq.s32.totalorder %s24, 0
      %p108 = por %p106, %p107
      %p109 = scmp.ne.s32.totalorder %s97, %s98
      %p110 = scmp.eq.s32.totalorder %s25, 1
      %p111 = por %p109, %p110
      %p113 = scmp.ne.s32.totalorder %s98, %s112
      %p114 = scmp.eq.s32.totalorder %s25, 0
      %p115 = por %p113, %p114
      %s117 = sadd.s32 %s116, 1
      %p120 = scmp.eq.s32.totalorder %s19, 1
      %p121 = scmp.ne.s32.totalorder %s116, %s118
      %p122 = scmp.eq.s32.totalorder %s19, 0
      %p123 = por %p121, %p122
      %p124 = scmp.ne.s32.totalorder %s116, %s118
      %p125 = scmp.eq.s32.totalorder %s24, 1
      %p126 = por %p124, %p125
      %p127 = scmp.ne.s32.totalorder %s118, %s119
      %p128 = scmp.eq.s32.totalorder %s24, 0
      %p129 = por %p127, %p128
      %p130 = scmp.ne.s32.totalorder %s118, %s119
      %p131 = scmp.eq.s32.totalorder %s25, 1
      %p132 = por %p130, %p131
      %p134 = scmp.ne.s32.totalorder %s119, %s133
      %p135 = scmp.eq.s32.totalorder %s25, 0
      %p136 = por %p134, %p135
      %s138 = sadd.s32 %s137, 1
      %p141 = scmp.eq.s32.totalorder %s19, 1
      %p142 = scmp.ne.s32.totalorder %s137, %s139
      %p143 = scmp.eq.s32.totalorder %s19, 0
      %p144 = por %p142, %p143
      %p145 = scmp.ne.s32.totalorder %s137, %s139
      %p146 = scmp.eq.s32.totalorder %s24, 1
      %p147 = por %p145, %p146
      %p148 = scmp.ne.s32.totalorder %s139, %s140
      %p149 = scmp.eq.s32.totalorder %s24, 0
      %p150 = por %p148, %p149
      %p151 = scmp.ne.s32.totalorder %s139, %s140
      %p152 = scmp.eq.s32.totalorder %s25, 1
      %p153 = por %p151, %p152
      %p155 = scmp.ne.s32.totalorder %s140, %s154
      %p156 = scmp.eq.s32.totalorder %s25, 0
      %p157 = por %p155, %p156
      %s159 = sadd.s32 %s158, 1
      %p162 = scmp.eq.s32.totalorder %s19, 1
      %p163 = scmp.ne.s32.totalorder %s158, %s160
      %p164 = scmp.eq.s32.totalorder %s19, 0
      %p165 = por %p163, %p164
      %p166 = scmp.ne.s32.totalorder %s158, %s160
      %p167 = scmp.eq.s32.totalorder %s24, 1
      %p168 = por %p166, %p167
      %p169 = scmp.ne.s32.totalorder %s160, %s161
      %p170 = scmp.eq.s32.totalorder %s24, 0
      %p171 = por %p169, %p170
      %p172 = scmp.ne.s32.totalorder %s160, %s161
      %p173 = scmp.eq.s32.totalorder %s25, 1
      %p174 = por %p172, %p173
      %p176 = scmp.ne.s32.totalorder %s161, %s175
      %p177 = scmp.eq.s32.totalorder %s25, 0
      %p178 = por %p176, %p177
      %s180 = sadd.s32 %s179, 1
      %p183 = scmp.eq.s32.totalorder %s19, 1
      %p184 = scmp.ne.s32.totalorder %s179, %s181
      %p185 = scmp.eq.s32.totalorder %s19, 0
      %p186 = por %p184, %p185
      %p187 = scmp.ne.s32.totalorder %s179, %s181
      %p188 = scmp.eq.s32.totalorder %s24, 1
      %p189 = por %p187, %p188
      %p190 = scmp.ne.s32.totalorder %s181, %s182
      %p191 = scmp.eq.s32.totalorder %s24, 0
      %p192 = por %p190, %p191
      %p193 = scmp.ne.s32.totalorder %s181, %s182
      %p194 = scmp.eq.s32.totalorder %s25, 1
      %p195 = por %p193, %p194
      %p197 = scmp.ne.s32.totalorder %s182, %s196
      %p198 = scmp.eq.s32.totalorder %s25, 0
      %p199 = por %p197, %p198
      %s200 = ssub.s32 %s19, %s26
      %p201 = scmp.eq.s32.totalorder %s200, 0
      %s203 = sadd.s32 %s202, 1
      %s204 = scalar_select %p201, %s202, %s203
      %p207 = pneg %p201
      %p208 = scmp.eq.s32.totalorder %s19, 1
      %p209 = por %p207, %p208
      %p210 = scmp.ne.s32.totalorder %s202, %s205
      %p211 = scmp.eq.s32.totalorder %s19, 0
      %p212 = por %p210, %p211
      %p213 = scmp.ne.s32.totalorder %s202, %s205
      %p214 = scmp.eq.s32.totalorder %s24, 1
      %p215 = por %p213, %p214
      %p216 = scmp.ne.s32.totalorder %s205, %s206
      %p217 = scmp.eq.s32.totalorder %s24, 0
      %p218 = por %p216, %p217
      %p219 = scmp.ne.s32.totalorder %s205, %s206
      %p220 = scmp.eq.s32.totalorder %s25, 1
      %p221 = por %p219, %p220
      %p223 = scmp.ne.s32.totalorder %s206, %s222
      %p224 = scmp.eq.s32.totalorder %s25, 0
      %p225 = por %p223, %p224
      %p226 = scmp.le.s32.totalorder 1, %s19
      %p227 = scmp.lt.s32.totalorder %s19, 3
      %p228 = pnand %p226, %p227
      %p229 = pneg %p228
      // Predicated region
      $region9: #{tpu_custom_call.1} parent=5 // pred_check
        _
      $region10: #{tpu_custom_call.1} parent=5 // pred_check_branch
        %231 = sbr.rel (%p228) target = $region12
      $region11: #{tpu_custom_call.1} parent=5 // pred_region
        %s232 = ssub.s32 %s19, 1
        // Predicated region
        $region13: #{tpu_custom_call.1} parent=11 // pred_check
          %p233 = pneg %p66
        $region14: #{tpu_custom_call.1} parent=11 // pred_check_branch
          %235 = sbr.rel (%p233) target = $region16
        $region15: #{tpu_custom_call.1} parent=11 // pred_region
          %s237 = ssub.s32 512, 512
          %238 = vsyncadd [#allocation3], %s237
          %s239 = sshll.u32 [#allocation2], 4
          %s240 = int_to_ptr.vmem [resolvable:$true] %s239
          %245 = dma.hbm_to_vmem [thread:$0]  %s1, 512, %s240, [#allocation3], 256, 256, 16
        $region16: #{tpu_custom_call.1} parent=11 // pred_fallthru
          _
        // Predicated region
        $region17: #{tpu_custom_call.1} parent=11 // pred_check
          %p246 = pneg %p87
        $region18: #{tpu_custom_call.1} parent=11 // pred_check_branch
          %248 = sbr.rel (%p246) target = $region20
        $region19: #{tpu_custom_call.1} parent=11 // pred_region
          _
        $region20: #{tpu_custom_call.1} parent=11 // pred_fallthru
          _
        // Predicated region
        $region21: #{tpu_custom_call.1} parent=11 // pred_check
          %p249 = pneg %p108
        $region22: #{tpu_custom_call.1} parent=11 // pred_check_branch
          %251 = sbr.rel (%p249) target = $region24
        $region23: #{tpu_custom_call.1} parent=11 // pred_region
          _
        $region24: #{tpu_custom_call.1} parent=11 // pred_fallthru
          _
        // Predicated region
        $region25: #{tpu_custom_call.1} parent=11 // pred_check
          %p252 = pneg %p129
        $region26: #{tpu_custom_call.1} parent=11 // pred_check_branch
          %254 = sbr.rel (%p252) target = $region28
        $region27: #{tpu_custom_call.1} parent=11 // pred_region
          %s256 = ssub.s32 384, 384
          %257 = vsyncadd [#allocation6], %s256
          %s258 = sshll.u32 [#allocation5], 4
          %s259 = int_to_ptr.vmem [resolvable:$true] %s258
          %264 = dma.hbm_to_vmem [thread:$0]  %s4, 384, %s259, [#allocation6], 128, 128, 8
        $region28: #{tpu_custom_call.1} parent=11 // pred_fallthru
          _
        // Predicated region
        $region29: #{tpu_custom_call.1} parent=11 // pred_check
          %p265 = pneg %p150
        $region30: #{tpu_custom_call.1} parent=11 // pred_check_branch
          %267 = sbr.rel (%p265) target = $region32
        $region31: #{tpu_custom_call.1} parent=11 // pred_region
          %s269 = ssub.s32 512, 512
          %270 = vsyncadd [#allocation6], %s269
          %s271 = sshll.u32 [#allocation7], 4
          %s272 = int_to_ptr.vmem [resolvable:$true] %s271
          %277 = dma.hbm_to_vmem [thread:$0]  %s5, 512, %s272, [#allocation6], 128, 128, 8
        $region32: #{tpu_custom_call.1} parent=11 // pred_fallthru
          _
        // Predicated region
        $region33: #{tpu_custom_call.1} parent=11 // pred_check
          %p278 = pneg %p171
        $region34: #{tpu_custom_call.1} parent=11 // pred_check_branch
          %280 = sbr.rel (%p278) target = $region36
        $region35: #{tpu_custom_call.1} parent=11 // pred_region
          _
        $region36: #{tpu_custom_call.1} parent=11 // pred_fallthru
          _
        // Predicated region
        $region37: #{tpu_custom_call.1} parent=11 // pred_check
          %p281 = pneg %p192
        $region38: #{tpu_custom_call.1} parent=11 // pred_check_branch
          %283 = sbr.rel (%p281) target = $region40
        $region39: #{tpu_custom_call.1} parent=11 // pred_region
          _
        $region40: #{tpu_custom_call.1} parent=11 // pred_fallthru
          _
      $region12: #{tpu_custom_call.1} parent=5 // pred_fallthru
        _
      %p284 = scmp.lt.s32.totalorder %s19, 2
      // Predicated region
      $region41: #{tpu_custom_call.1} parent=5 // pred_check
        %p285 = pneg %p284
      $region42: #{tpu_custom_call.1} parent=5 // pred_check_branch
        %287 = sbr.rel (%p285) target = $region44
      $region43: #{tpu_custom_call.1} parent=5 // pred_region
        // Predicated region
        $region45: #{tpu_custom_call.1} parent=43 // pred_check
          %p288 = pneg %p39
        $region46: #{tpu_custom_call.1} parent=43 // pred_check_branch
          %290 = sbr.rel (%p288) target = $region48
        $region47: #{tpu_custom_call.1} parent=43 // pred_region
          %s291 = smul.u32 2, %s19
          %p292 = scmp.lt.s32.totalorder %s291, 3
          %s293 = scalar_select %p292, %s291, 3
          %s294 = smul.addr %s293, 8
          %s295 = scalar_lea.vmem %s0, %s294
          %s296 = smul.u32 2, %s19
        $region48: #{tpu_custom_call.1} parent=43 // pred_fallthru
          _
      $region44: #{tpu_custom_call.1} parent=5 // pred_fallthru
        _
      %p297 = scmp.le.s32.totalorder 1, %s19
      %p298 = scmp.lt.s32.totalorder %s19, 3
      %p299 = pnand %p297, %p298
      %p300 = pneg %p299
      // Predicated region
      $region49: #{tpu_custom_call.1} parent=5 // pred_check
        _
      $region50: #{tpu_custom_call.1} parent=5 // pred_check_branch
        %302 = sbr.rel (%p299) target = $region52
      $region51: #{tpu_custom_call.1} parent=5 // pred_region
        %s303 = ssub.s32 %s19, 1
        // Predicated region
        $region53: #{tpu_custom_call.1} parent=51 // pred_check
          %p304 = pneg %p66
        $region54: #{tpu_custom_call.1} parent=51 // pred_check_branch
          %306 = sbr.rel (%p304) target = $region56
        $region55: #{tpu_custom_call.1} parent=51 // pred_region
          %307 = dma.done [#allocation3], 512
        $region56: #{tpu_custom_call.1} parent=51 // pred_fallthru
          _
        // Predicated region
        $region57: #{tpu_custom_call.1} parent=51 // pred_check
          %p308 = pneg %p129
        $region58: #{tpu_custom_call.1} parent=51 // pred_check_branch
          %310 = sbr.rel (%p308) target = $region60
        $region59: #{tpu_custom_call.1} parent=51 // pred_region
          %311 = dma.done [#allocation6], 384
        $region60: #{tpu_custom_call.1} parent=51 // pred_fallthru
          _
        // Predicated region
        $region61: #{tpu_custom_call.1} parent=51 // pred_check
          %p312 = pneg %p150
        $region62: #{tpu_custom_call.1} parent=51 // pred_check_branch
          %314 = sbr.rel (%p312) target = $region64
        $region63: #{tpu_custom_call.1} parent=51 // pred_region
          %315 = dma.done [#allocation6], 512
        $region64: #{tpu_custom_call.1} parent=51 // pred_fallthru
          _
        %s316 = smul.u32 2, %s24
        %p317 = scmp.lt.s32.totalorder %s316, 3
        %s318 = scalar_select %p317, %s316, 3
        %s319 = smul.addr %s318, 8
        %s320 = scalar_lea.vmem %s0, %s319
        %p321 = pneg %p45
        %p322 = pneg %p42
        %p323 = pneg %p66
        %p324 = pneg %p63
        %p325 = pneg %p87
        %p326 = pneg %p84
        %p327 = pneg %p108
        %p328 = pneg %p105
        %p329 = pneg %p129
        %p330 = pneg %p126
        %p331 = pneg %p150
        %p332 = pneg %p147
        %p333 = pneg %p171
        %p334 = pneg %p168
        %p335 = pneg %p192
        %p336 = pneg %p189
        %p337 = pneg %p218
        %p338 = pneg %p215
        %s339 = sand.u32 %s205, 1
        %s340 = scalar_lea.sflag [#allocation4], %s339
        %s341 = sand.u32 %s205, 1
        %s342 = smul.addr %s341, 16
        %s343 = scalar_lea.vmem [#allocation8], %s342
        %s344 = smul.u32 2, %s24
        %p345 = scmp.lt.s32.totalorder %s344, 3
        %s346 = scalar_select %p345, %s344, 3
        %s347 = smul.addr %s346, 8
        %s348 = scalar_lea.vmem %s0, %s347
        %s349 = smul.u32 2, %s24
        %s350 = smul.u32 2, %s24
        %v352 = vld [vmem:[%s348] sm:$0xff]
        %v353 = vld [vmem:[%s348 + $0x8] sm:$0xff]
        %v354 = vld [vmem:[%s2] sm:$0xf]
        %v355 = vld [vmem:[%s2 + $0x4] sm:$0xf]
        %v356 = vld [vmem:[%s2 + $0x8] sm:$0xf]
        %v357 = vld [vmem:[%s2 + $0xc] sm:$0xf]
        %v358 = vld [vmem:[%s2 + $0x10] sm:$0xf]
        %v359 = vld [vmem:[%s2 + $0x14] sm:$0xf]
        %v360 = vpack.c.bf16 %v352, %v352
        %v361 = vpack.c.bf16 %v353, %v353
        %v368 = vunpack.c.l.b16 %v354
        %v369 = vunpack.c.l.b16 %v355
        %v370 = vunpack.c.l.b16 %v356
        %v371 = vunpack.c.l.b16 %v357
        %v372 = vunpack.c.l.b16 %v358
        %v373 = vunpack.c.l.b16 %v359
        %v374 = vpack.c.b16 %v369, %v368
        %v375 = vpack.c.b16 %v371, %v370
        %v376 = vpack.c.b16 %v373, %v372
        %vm377 = vcmask 64512
        %v379 = vsel %vm377, %v374, 0
        %v382 = vsel %vm377, %v375, 0
        %v385 = vsel %vm377, %v376, 0
        %vm387 = vcmask 1043456
        %v389 = vsel %vm387, %v360, 0
        %v392 = vsel %vm387, %v361, 0
        %394 = vmatprep.subr.bf16.mxu0 %v392
        %395 = vmatpush1.bf16.msra.mxu0 %v389
        %396 = vmatprep.subr.bf16.mxu0 0
        %397 = vmatpush1.bf16.msra.mxu0 0
        %398 = vmatprep.subr.bf16.mxu0 0
        %399 = vmatpush1.bf16.msra.mxu0 0
        %400 = vmatprep.subr.bf16.mxu0 0
        %401 = vmatpush1.bf16.msra.mxu0 0
        %402 = vmatprep.subr.bf16.mxu0 0
        %403 = vmatpush1.bf16.msra.mxu0 0
        %404 = vmatprep.subr.bf16.mxu0 0
        %405 = vmatpush1.bf16.msra.mxu0 0
        %406 = vmatprep.subr.bf16.mxu0 0
        %407 = vmatpush1.bf16.msra.mxu0 0
        %408 = vmatprep.subr.bf16.mxu0 0
        %409 = vmatpush1.bf16.msra.mxu0 0
        %410 = vmatprep.subr.bf16.mxu0 0
        %411 = vmatpush1.bf16.msra.mxu0 0
        %412 = vmatprep.subr.bf16.mxu0 0
        %413 = vmatpush1.bf16.msra.mxu0 0
        %414 = vmatprep.subr.bf16.mxu0 0
        %415 = vmatpush1.bf16.msra.mxu0 0
        %416 = vmatprep.subr.bf16.mxu0 0
        %417 = vmatpush1.bf16.msra.mxu0 0
        %418 = vmatprep.subr.bf16.mxu0 0
        %419 = vmatpush1.bf16.msra.mxu0 0
        %420 = vmatprep.subr.bf16.mxu0 0
        %421 = vmatpush1.bf16.msra.mxu0 0
        %422 = vmatprep.subr.bf16.mxu0 0
        %423 = vmatpush1.bf16.msra.mxu0 0
        %424 = vmatprep.subr.bf16.mxu0 0
        %425 = vmatpush1.bf16.msra.mxu0 0
        %426 = vmatprep.mubr.bf16.mxu0 0
        %427 = vmatmul.mubr.bf16.gmra.mrb[0].mxu0 %v379
        %v428 = vpop.f32.mrb[0].mxu0
        %v429 = vadd.f32 0.0, %v428
        %v430 = vpop.f32.mrb[0].mxu0
        %v431 = vadd.f32 0.0, %v430
        %v432 = vpop.f32.mrb[0].mxu0
        %v433 = vadd.f32 0.0, %v432
        %v434 = vpop.f32.mrb[0].mxu0
        %v435 = vadd.f32 0.0, %v434
        %436 = vmatprep.mubr.bf16.mxu0 0
        %437 = vmatmul.mubr.bf16.gmra.mrb[0].mxu0 %v382
        %v438 = vpop.f32.mrb[0].mxu0
        %v439 = vadd.f32 0.0, %v438
        %v440 = vpop.f32.mrb[0].mxu0
        %v441 = vadd.f32 0.0, %v440
        %v442 = vpop.f32.mrb[0].mxu0
        %v443 = vadd.f32 0.0, %v442
        %v444 = vpop.f32.mrb[0].mxu0
        %v445 = vadd.f32 0.0, %v444
        %446 = vmatprep.mubr.bf16.mxu0 0
        %447 = vmatmul.mubr.bf16.gmra.mrb[0].mxu0 %v385
        %v448 = vpop.f32.mrb[0].mxu0
        %v449 = vadd.f32 0.0, %v448
        %v450 = vpop.f32.mrb[0].mxu0
        %v451 = vadd.f32 0.0, %v450
        %v452 = vpop.f32.mrb[0].mxu0
        %v453 = vadd.f32 0.0, %v452
        %v454 = vpop.f32.mrb[0].mxu0
        %v455 = vadd.f32 0.0, %v454
        %456 = vdwg.mxu0
        %v457 = vmax.f32 %v429, 0.0
        %v458 = vmax.f32 %v431, 0.0
        %v459 = vmax.f32 %v433, 0.0
        %v460 = vmax.f32 %v435, 0.0
        %v461 = vmax.f32 %v439, 0.0
        %v462 = vmax.f32 %v441, 0.0
        %v463 = vmax.f32 %v443, 0.0
        %v464 = vmax.f32 %v445, 0.0
        %v465 = vmax.f32 %v449, 0.0
        %v466 = vmax.f32 %v451, 0.0
        %v467 = vmax.f32 %v453, 0.0
        %v468 = vmax.f32 %v455, 0.0
        %469 = vrot.lane.b32.xlu0 %v461, 17
        %v470 = vpop.permute.xlu0 %469
        %471 = vrot.lane.b32.xlu0 %v463, 17
        %v472 = vpop.permute.xlu0 %471
        %473 = vrot.lane.b32.xlu0 %v465, 17
        %v474 = vpop.permute.xlu0 %473
        %475 = vrot.lane.b32.xlu0 %v467, 17
        %v476 = vpop.permute.xlu0 %475
        %477 = vrot.lane.b32.xlu0 %v462, 17
        %v478 = vpop.permute.xlu0 %477
        %479 = vrot.lane.b32.xlu0 %v464, 17
        %v480 = vpop.permute.xlu0 %479
        %481 = vrot.lane.b32.xlu0 %v466, 17
        %v482 = vpop.permute.xlu0 %481
        %483 = vrot.lane.b32.xlu0 %v468, 17
        %v484 = vpop.permute.xlu0 %483
        %v485 = vlaneseq
        %v486 = vand.u32 %v485, 127
        %vm487 = vcmp.lt.s32.totalorder %v486, 17
        %v488 = vsel %vm487, %v470, %v478
        %v489 = vsel %vm487, %v472, %v480
        %v490 = vsel %vm487, %v474, %v482
        %v491 = vsel %vm487, %v476, %v484
        %v492 = vsel %vm487, %v478, %v470
        %v493 = vsel %vm487, %v480, %v472
        %v494 = vsel %vm487, %v482, %v474
        %v495 = vsel %vm487, %v484, %v476
        %v496 = vld [vmem:[#allocation2] ss:$8 sm:$0x3]
        %v498 = vlaneseq
        %v499 = vshrl.u32 %v498, 7
        %v500 = vsub.s32 0, %v499
        %v501 = vrot.slane %v496, %v500
        %v502 = vlaneseq
        %v503 = vshrl.u32 %v502, 7
        %v504 = vsub.s32 1, %v503
        %v505 = vrot.slane %v496, %v504
        %v508 = vmul.f32 %v492, %v501
        %v509 = vmul.f32 %v488, %v505
        %v510 = vmul.f32 %v493, %v501
        %v511 = vmul.f32 %v489, %v505
        %v512 = vmul.f32 %v494, %v501
        %v513 = vmul.f32 %v490, %v505
        %v514 = vmul.f32 %v495, %v501
        %v515 = vmul.f32 %v491, %v505
        %516 = vrot.lane.b32.xlu0 %v461, 16
        %v517 = vpop.permute.xlu0 %516
        %518 = vrot.lane.b32.xlu0 %v463, 16
        %v519 = vpop.permute.xlu0 %518
        %520 = vrot.lane.b32.xlu0 %v465, 16
        %v521 = vpop.permute.xlu0 %520
        %522 = vrot.lane.b32.xlu0 %v467, 16
        %v523 = vpop.permute.xlu0 %522
        %524 = vrot.lane.b32.xlu0 %v462, 16
        %v525 = vpop.permute.xlu0 %524
        %526 = vrot.lane.b32.xlu0 %v464, 16
        %v527 = vpop.permute.xlu0 %526
        %528 = vrot.lane.b32.xlu0 %v466, 16
        %v529 = vpop.permute.xlu0 %528
        %530 = vrot.lane.b32.xlu0 %v468, 16
        %v531 = vpop.permute.xlu0 %530
        %vm532 = vcmp.lt.s32.totalorder %v486, 16
        %v533 = vsel %vm532, %v517, %v525
        %v534 = vsel %vm532, %v519, %v527
        %v535 = vsel %vm532, %v521, %v529
        %v536 = vsel %vm532, %v523, %v531
        %v537 = vsel %vm532, %v525, %v517
        %v538 = vsel %vm532, %v527, %v519
        %v539 = vsel %vm532, %v529, %v521
        %v540 = vsel %vm532, %v531, %v523
        %s541 = scalar_lea.vmem [#allocation2], 1
        %v542 = vld [vmem:[%s541] ss:$8 sm:$0x3]
        %v544 = vlaneseq
        %v545 = vshrl.u32 %v544, 7
        %v546 = vsub.s32 0, %v545
        %v547 = vrot.slane %v542, %v546
        %v548 = vlaneseq
        %v549 = vshrl.u32 %v548, 7
        %v550 = vsub.s32 1, %v549
        %v551 = vrot.slane %v542, %v550
        %v554 = vmul.f32 %v537, %v547
        %v555 = vmul.f32 %v533, %v551
        %v556 = vmul.f32 %v538, %v547
        %v557 = vmul.f32 %v534, %v551
        %v558 = vmul.f32 %v539, %v547
        %v559 = vmul.f32 %v535, %v551
        %v560 = vmul.f32 %v540, %v547
        %v561 = vmul.f32 %v536, %v551
        %562 = vrot.lane.b32.xlu0 %v461, 15
        %v563 = vpop.permute.xlu0 %562
        %564 = vrot.lane.b32.xlu0 %v463, 15
        %v565 = vpop.permute.xlu0 %564
        %566 = vrot.lane.b32.xlu0 %v465, 15
        %v567 = vpop.permute.xlu0 %566
        %568 = vrot.lane.b32.xlu0 %v467, 15
        %v569 = vpop.permute.xlu0 %568
        %570 = vrot.lane.b32.xlu0 %v462, 15
        %v571 = vpop.permute.xlu0 %570
        %572 = vrot.lane.b32.xlu0 %v464, 15
        %v573 = vpop.permute.xlu0 %572
        %574 = vrot.lane.b32.xlu0 %v466, 15
        %v575 = vpop.permute.xlu0 %574
        %576 = vrot.lane.b32.xlu0 %v468, 15
        %v577 = vpop.permute.xlu0 %576
        %vm578 = vcmp.lt.s32.totalorder %v486, 15
        %v579 = vsel %vm578, %v563, %v571
        %v580 = vsel %vm578, %v565, %v573
        %v581 = vsel %vm578, %v567, %v575
        %v582 = vsel %vm578, %v569, %v577
        %v583 = vsel %vm578, %v571, %v563
        %v584 = vsel %vm578, %v573, %v565
        %v585 = vsel %vm578, %v575, %v567
        %v586 = vsel %vm578, %v577, %v569
        %s587 = scalar_lea.vmem [#allocation2], 2
        %v588 = vld [vmem:[%s587] ss:$8 sm:$0x3]
        %v590 = vlaneseq
        %v591 = vshrl.u32 %v590, 7
        %v592 = vsub.s32 0, %v591
        %v593 = vrot.slane %v588, %v592
        %v594 = vlaneseq
        %v595 = vshrl.u32 %v594, 7
        %v596 = vsub.s32 1, %v595
        %v597 = vrot.slane %v588, %v596
        %v600 = vmul.f32 %v583, %v593
        %v601 = vmul.f32 %v579, %v597
        %v602 = vmul.f32 %v584, %v593
        %v603 = vmul.f32 %v580, %v597
        %v604 = vmul.f32 %v585, %v593
        %v605 = vmul.f32 %v581, %v597
        %v606 = vmul.f32 %v586, %v593
        %v607 = vmul.f32 %v582, %v597
        %608 = vrot.lane.b32.xlu0 %v461, 1
        %v609 = vpop.permute.xlu0 %608
        %610 = vrot.lane.b32.xlu0 %v463, 1
        %v611 = vpop.permute.xlu0 %610
        %612 = vrot.lane.b32.xlu0 %v465, 1
        %v613 = vpop.permute.xlu0 %612
        %614 = vrot.lane.b32.xlu0 %v467, 1
        %v615 = vpop.permute.xlu0 %614
        %616 = vrot.lane.b32.xlu0 %v462, 1
        %v617 = vpop.permute.xlu0 %616
        %618 = vrot.lane.b32.xlu0 %v464, 1
        %v619 = vpop.permute.xlu0 %618
        %620 = vrot.lane.b32.xlu0 %v466, 1
        %v621 = vpop.permute.xlu0 %620
        %622 = vrot.lane.b32.xlu0 %v468, 1
        %v623 = vpop.permute.xlu0 %622
        %vm624 = vcmp.lt.s32.totalorder %v486, 1
        %v625 = vsel %vm624, %v609, %v617
        %v626 = vsel %vm624, %v611, %v619
        %v627 = vsel %vm624, %v613, %v621
        %v628 = vsel %vm624, %v615, %v623
        %v629 = vsel %vm624, %v617, %v609
        %v630 = vsel %vm624, %v619, %v611
        %v631 = vsel %vm624, %v621, %v613
        %v632 = vsel %vm624, %v623, %v615
        %s633 = scalar_lea.vmem [#allocation2], 3
        %v634 = vld [vmem:[%s633] ss:$8 sm:$0x3]
        %v636 = vlaneseq
        %v637 = vshrl.u32 %v636, 7
        %v638 = vsub.s32 0, %v637
        %v639 = vrot.slane %v634, %v638
        %v640 = vlaneseq
        %v641 = vshrl.u32 %v640, 7
        %v642 = vsub.s32 1, %v641
        %v643 = vrot.slane %v634, %v642
        %v646 = vmul.f32 %v629, %v639
        %v647 = vmul.f32 %v625, %v643
        %v648 = vmul.f32 %v630, %v639
        %v649 = vmul.f32 %v626, %v643
        %v650 = vmul.f32 %v631, %v639
        %v651 = vmul.f32 %v627, %v643
        %v652 = vmul.f32 %v632, %v639
        %v653 = vmul.f32 %v628, %v643
        %654 = vrot.lane.b32.xlu0 %v461, 127
        %v655 = vpop.permute.xlu0 %654
        %656 = vrot.lane.b32.xlu0 %v463, 127
        %v657 = vpop.permute.xlu0 %656
        %658 = vrot.lane.b32.xlu0 %v465, 127
        %v659 = vpop.permute.xlu0 %658
        %660 = vrot.lane.b32.xlu0 %v467, 127
        %v661 = vpop.permute.xlu0 %660
        %662 = vrot.lane.b32.xlu0 %v462, 127
        %v663 = vpop.permute.xlu0 %662
        %664 = vrot.lane.b32.xlu0 %v464, 127
        %v665 = vpop.permute.xlu0 %664
        %666 = vrot.lane.b32.xlu0 %v466, 127
        %v667 = vpop.permute.xlu0 %666
        %668 = vrot.lane.b32.xlu0 %v468, 127
        %v669 = vpop.permute.xlu0 %668
        %vm670 = vcmp.lt.s32.totalorder %v486, 127
        %v671 = vsel %vm670, %v655, %v663
        %v672 = vsel %vm670, %v657, %v665
        %v673 = vsel %vm670, %v659, %v667
        %v674 = vsel %vm670, %v661, %v669
        %v675 = vsel %vm670, %v663, %v655
        %v676 = vsel %vm670, %v665, %v657
        %v677 = vsel %vm670, %v667, %v659
        %v678 = vsel %vm670, %v669, %v661
        %s679 = scalar_lea.vmem [#allocation2], 5
        %v680 = vld [vmem:[%s679] ss:$8 sm:$0x3]
        %v682 = vlaneseq
        %v683 = vshrl.u32 %v682, 7
        %v684 = vsub.s32 0, %v683
        %v685 = vrot.slane %v680, %v684
        %v686 = vlaneseq
        %v687 = vshrl.u32 %v686, 7
        %v688 = vsub.s32 1, %v687
        %v689 = vrot.slane %v680, %v688
        %v692 = vmul.f32 %v671, %v685
        %v693 = vmul.f32 %v675, %v689
        %v694 = vmul.f32 %v672, %v685
        %v695 = vmul.f32 %v676, %v689
        %v696 = vmul.f32 %v673, %v685
        %v697 = vmul.f32 %v677, %v689
        %v698 = vmul.f32 %v674, %v685
        %v699 = vmul.f32 %v678, %v689
        %700 = vrot.lane.b32.xlu0 %v461, 113
        %v701 = vpop.permute.xlu0 %700
        %702 = vrot.lane.b32.xlu0 %v463, 113
        %v703 = vpop.permute.xlu0 %702
        %704 = vrot.lane.b32.xlu0 %v465, 113
        %v705 = vpop.permute.xlu0 %704
        %706 = vrot.lane.b32.xlu0 %v467, 113
        %v707 = vpop.permute.xlu0 %706
        %708 = vrot.lane.b32.xlu0 %v462, 113
        %v709 = vpop.permute.xlu0 %708
        %710 = vrot.lane.b32.xlu0 %v464, 113
        %v711 = vpop.permute.xlu0 %710
        %712 = vrot.lane.b32.xlu0 %v466, 113
        %v713 = vpop.permute.xlu0 %712
        %714 = vrot.lane.b32.xlu0 %v468, 113
        %v715 = vpop.permute.xlu0 %714
        %vm716 = vcmp.lt.s32.totalorder %v486, 113
        %v717 = vsel %vm716, %v701, %v709
        %v718 = vsel %vm716, %v703, %v711
        %v719 = vsel %vm716, %v705, %v713
        %v720 = vsel %vm716, %v707, %v715
        %v721 = vsel %vm716, %v709, %v701
        %v722 = vsel %vm716, %v711, %v703
        %v723 = vsel %vm716, %v713, %v705
        %v724 = vsel %vm716, %v715, %v707
        %s725 = scalar_lea.vmem [#allocation2], 6
        %v726 = vld [vmem:[%s725] ss:$8 sm:$0x3]
        %v728 = vlaneseq
        %v729 = vshrl.u32 %v728, 7
        %v730 = vsub.s32 0, %v729
        %v731 = vrot.slane %v726, %v730
        %v732 = vlaneseq
        %v733 = vshrl.u32 %v732, 7
        %v734 = vsub.s32 1, %v733
        %v735 = vrot.slane %v726, %v734
        %v738 = vmul.f32 %v717, %v731
        %v739 = vmul.f32 %v721, %v735
        %v740 = vmul.f32 %v718, %v731
        %v741 = vmul.f32 %v722, %v735
        %v742 = vmul.f32 %v719, %v731
        %v743 = vmul.f32 %v723, %v735
        %v744 = vmul.f32 %v720, %v731
        %v745 = vmul.f32 %v724, %v735
        %746 = vrot.lane.b32.xlu0 %v461, 112
        %v747 = vpop.permute.xlu0 %746
        %748 = vrot.lane.b32.xlu0 %v463, 112
        %v749 = vpop.permute.xlu0 %748
        %750 = vrot.lane.b32.xlu0 %v465, 112
        %v751 = vpop.permute.xlu0 %750
        %752 = vrot.lane.b32.xlu0 %v467, 112
        %v753 = vpop.permute.xlu0 %752
        %754 = vrot.lane.b32.xlu0 %v462, 112
        %v755 = vpop.permute.xlu0 %754
        %756 = vrot.lane.b32.xlu0 %v464, 112
        %v757 = vpop.permute.xlu0 %756
        %758 = vrot.lane.b32.xlu0 %v466, 112
        %v759 = vpop.permute.xlu0 %758
        %760 = vrot.lane.b32.xlu0 %v468, 112
        %v761 = vpop.permute.xlu0 %760
        %vm762 = vcmp.lt.s32.totalorder %v486, 112
        %v763 = vsel %vm762, %v747, %v755
        %v764 = vsel %vm762, %v749, %v757
        %v765 = vsel %vm762, %v751, %v759
        %v766 = vsel %vm762, %v753, %v761
        %v767 = vsel %vm762, %v755, %v747
        %v768 = vsel %vm762, %v757, %v749
        %v769 = vsel %vm762, %v759, %v751
        %v770 = vsel %vm762, %v761, %v753
        %s771 = scalar_lea.vmem [#allocation2], 7
        %v772 = vld [vmem:[%s771] ss:$8 sm:$0x3]
        %v774 = vlaneseq
        %v775 = vshrl.u32 %v774, 7
        %v776 = vsub.s32 0, %v775
        %v777 = vrot.slane %v772, %v776
        %v778 = vlaneseq
        %v779 = vshrl.u32 %v778, 7
        %v780 = vsub.s32 1, %v779
        %v781 = vrot.slane %v772, %v780
        %v784 = vmul.f32 %v763, %v777
        %v785 = vmul.f32 %v767, %v781
        %v786 = vmul.f32 %v764, %v777
        %v787 = vmul.f32 %v768, %v781
        %v788 = vmul.f32 %v765, %v777
        %v789 = vmul.f32 %v769, %v781
        %v790 = vmul.f32 %v766, %v777
        %v791 = vmul.f32 %v770, %v781
        %792 = vrot.lane.b32.xlu0 %v461, 111
        %v793 = vpop.permute.xlu0 %792
        %794 = vrot.lane.b32.xlu0 %v463, 111
        %v795 = vpop.permute.xlu0 %794
        %796 = vrot.lane.b32.xlu0 %v465, 111
        %v797 = vpop.permute.xlu0 %796
        %798 = vrot.lane.b32.xlu0 %v467, 111
        %v799 = vpop.permute.xlu0 %798
        %800 = vrot.lane.b32.xlu0 %v462, 111
        %v801 = vpop.permute.xlu0 %800
        %802 = vrot.lane.b32.xlu0 %v464, 111
        %v803 = vpop.permute.xlu0 %802
        %804 = vrot.lane.b32.xlu0 %v466, 111
        %v805 = vpop.permute.xlu0 %804
        %806 = vrot.lane.b32.xlu0 %v468, 111
        %v807 = vpop.permute.xlu0 %806
        %vm808 = vcmp.lt.s32.totalorder %v486, 111
        %v809 = vsel %vm808, %v793, %v801
        %v810 = vsel %vm808, %v795, %v803
        %v811 = vsel %vm808, %v797, %v805
        %v812 = vsel %vm808, %v799, %v807
        %v813 = vsel %vm808, %v801, %v793
        %v814 = vsel %vm808, %v803, %v795
        %v815 = vsel %vm808, %v805, %v797
        %v816 = vsel %vm808, %v807, %v799
        %s817 = scalar_lea.vmem [#allocation2], 16
        %v818 = vld [vmem:[%s817] ss:$8 sm:$0x3]
        %v820 = vlaneseq
        %v821 = vshrl.u32 %v820, 7
        %v822 = vsub.s32 0, %v821
        %v823 = vrot.slane %v818, %v822
        %v824 = vlaneseq
        %v825 = vshrl.u32 %v824, 7
        %v826 = vsub.s32 1, %v825
        %v827 = vrot.slane %v818, %v826
        %v830 = vmul.f32 %v809, %v823
        %v831 = vmul.f32 %v813, %v827
        %v832 = vmul.f32 %v810, %v823
        %v833 = vmul.f32 %v814, %v827
        %v834 = vmul.f32 %v811, %v823
        %v835 = vmul.f32 %v815, %v827
        %v836 = vmul.f32 %v812, %v823
        %v837 = vmul.f32 %v816, %v827
        %v838 = vld [vmem:[%s3] sm:$0xff]
        %v839 = vld [vmem:[%s3 + $0x8] sm:$0xff]
        %v840 = vpack.c.bf16 %v510, %v508
        %v841 = vpack.c.bf16 %v511, %v509
        %v842 = vpack.c.bf16 %v556, %v554
        %v843 = vpack.c.bf16 %v557, %v555
        %v844 = vpack.c.bf16 %v602, %v600
        %v845 = vpack.c.bf16 %v603, %v601
        %v846 = vpack.c.bf16 %v648, %v646
        %v847 = vpack.c.bf16 %v649, %v647
        %v848 = vpack.c.bf16 %v463, %v461
        %v849 = vpack.c.bf16 %v464, %v462
        %v850 = vpack.c.bf16 %v694, %v692
        %v851 = vpack.c.bf16 %v695, %v693
        %v852 = vpack.c.bf16 %v740, %v738
        %v853 = vpack.c.bf16 %v741, %v739
        %v854 = vpack.c.bf16 %v786, %v784
        %v855 = vpack.c.bf16 %v787, %v785
        %v856 = vpack.c.bf16 %v832, %v830
        %v857 = vpack.c.bf16 %v833, %v831
        %v860 = vunpack.c.l.b16 %v838
        %v861 = vunpack.c.h.b16 %v838
        %v862 = vunpack.c.l.b16 %v839
        %v863 = vunpack.c.h.b16 %v839
        %v864 = vpack.c.b16 %v862, %v860
        %v865 = vpack.c.b16 %v863, %v861
        %vm867 = vcmask 130048
        %v869 = vsel %vm867, %v865, 0
        %871 = vmatprep.subr.bf16.mxu0 %v841
        %872 = vmatpush1.bf16.msra.mxu0 %v840
        %873 = vmatprep.subr.bf16.mxu0 %v843
        %874 = vmatpush1.bf16.msra.mxu0 %v842
        %875 = vmatprep.subr.bf16.mxu0 %v845
        %876 = vmatpush1.bf16.msra.mxu0 %v844
        %877 = vmatprep.subr.bf16.mxu0 %v847
        %878 = vmatpush1.bf16.msra.mxu0 %v846
        %879 = vmatprep.subr.bf16.mxu0 %v849
        %880 = vmatpush1.bf16.msra.mxu0 %v848
        %881 = vmatprep.subr.bf16.mxu0 %v851
        %882 = vmatpush1.bf16.msra.mxu0 %v850
        %883 = vmatprep.subr.bf16.mxu0 %v853
        %884 = vmatpush1.bf16.msra.mxu0 %v852
        %885 = vmatprep.subr.bf16.mxu0 %v855
        %886 = vmatpush1.bf16.msra.mxu0 %v854
        %887 = vmatprep.subr.bf16.mxu0 %v857
        %888 = vmatpush1.bf16.msra.mxu0 %v856
        %889 = vmatprep.subr.bf16.mxu0 0
        %890 = vmatpush1.bf16.msra.mxu0 0
        %891 = vmatprep.subr.bf16.mxu0 0
        %892 = vmatpush1.bf16.msra.mxu0 0
        %893 = vmatprep.subr.bf16.mxu0 0
        %894 = vmatpush1.bf16.msra.mxu0 0
        %895 = vmatprep.subr.bf16.mxu0 0
        %896 = vmatpush1.bf16.msra.mxu0 0
        %897 = vmatprep.subr.bf16.mxu0 0
        %898 = vmatpush1.bf16.msra.mxu0 0
        %899 = vmatprep.subr.bf16.mxu0 0
        %900 = vmatpush1.bf16.msra.mxu0 0
        %901 = vmatprep.subr.bf16.mxu0 0
        %902 = vmatpush1.bf16.msra.mxu0 0
        %903 = vmatprep.mubr.bf16.mxu0 %v869
        %904 = vmatmul.mubr.bf16.gmra.mrb[0].mxu0 %v864
        %v905 = vpop.f32.mrb[0].mxu0
        %v906 = vadd.f32 0.0, %v905
        %v907 = vpop.f32.mrb[0].mxu0
        %v908 = vadd.f32 0.0, %v907
        %v909 = vpop.f32.mrb[0].mxu0
        %v910 = vadd.f32 0.0, %v909
        %v911 = vpop.f32.mrb[0].mxu0
        %v912 = vadd.f32 0.0, %v911
        %913 = vdwg.mxu0
        %v914 = vmax.f32 %v906, 0.0
        %v915 = vmax.f32 %v908, 0.0
        %v916 = vmax.f32 %v910, 0.0
        %v917 = vmax.f32 %v912, 0.0
        %v918 = vld [vmem:[#allocation5] sm:$0xff]
        %v919 = vld [vmem:[#allocation5 + $0x8] sm:$0xff]
        %v920 = vld [vmem:[#allocation5 + $0x10] sm:$0xff]
        %v921 = vpack.c.bf16 %v514, %v512
        %v922 = vpack.c.bf16 %v515, %v513
        %v923 = vpack.c.bf16 %v560, %v558
        %v924 = vpack.c.bf16 %v561, %v559
        %v925 = vpack.c.bf16 %v606, %v604
        %v926 = vpack.c.bf16 %v607, %v605
        %v927 = vpack.c.bf16 %v652, %v650
        %v928 = vpack.c.bf16 %v653, %v651
        %v929 = vpack.c.bf16 %v467, %v465
        %v930 = vpack.c.bf16 %v468, %v466
        %v931 = vpack.c.bf16 %v698, %v696
        %v932 = vpack.c.bf16 %v699, %v697
        %v933 = vpack.c.bf16 %v744, %v742
        %v934 = vpack.c.bf16 %v745, %v743
        %v935 = vpack.c.bf16 %v790, %v788
        %v936 = vpack.c.bf16 %v791, %v789
        %v937 = vpack.c.bf16 %v836, %v834
        %v938 = vpack.c.bf16 %v837, %v835
        %v942 = vunpack.c.l.b16 %v918
        %v943 = vunpack.c.h.b16 %v918
        %v944 = vunpack.c.l.b16 %v919
        %v945 = vunpack.c.h.b16 %v919
        %v946 = vunpack.c.l.b16 %v920
        %v947 = vunpack.c.h.b16 %v920
        %v948 = vpack.c.b16 %v944, %v942
        %v949 = vpack.c.b16 %v945, %v943
        %v950 = vpack.c.b16 %v946, %v946
        %v951 = vpack.c.b16 %v947, %v947
        %v955 = vsel %vm867, %v949, 0
        %v958 = vsel %vm867, %v951, 0
        %960 = vmatprep.subr.bf16.mxu0 %v922
        %961 = vmatpush1.bf16.msra.mxu0 %v921
        %962 = vmatprep.subr.bf16.mxu0 %v924
        %963 = vmatpush1.bf16.msra.mxu0 %v923
        %964 = vmatprep.subr.bf16.mxu0 %v926
        %965 = vmatpush1.bf16.msra.mxu0 %v925
        %966 = vmatprep.subr.bf16.mxu0 %v928
        %967 = vmatpush1.bf16.msra.mxu0 %v927
        %968 = vmatprep.subr.bf16.mxu0 %v930
        %969 = vmatpush1.bf16.msra.mxu0 %v929
        %970 = vmatprep.subr.bf16.mxu0 %v932
        %971 = vmatpush1.bf16.msra.mxu0 %v931
        %972 = vmatprep.subr.bf16.mxu0 %v934
        %973 = vmatpush1.bf16.msra.mxu0 %v933
        %974 = vmatprep.subr.bf16.mxu0 %v936
        %975 = vmatpush1.bf16.msra.mxu0 %v935
        %976 = vmatprep.subr.bf16.mxu0 %v938
        %977 = vmatpush1.bf16.msra.mxu0 %v937
        %978 = vmatprep.subr.bf16.mxu0 0
        %979 = vmatpush1.bf16.msra.mxu0 0
        %980 = vmatprep.subr.bf16.mxu0 0
        %981 = vmatpush1.bf16.msra.mxu0 0
        %982 = vmatprep.subr.bf16.mxu0 0
        %983 = vmatpush1.bf16.msra.mxu0 0
        %984 = vmatprep.subr.bf16.mxu0 0
        %985 = vmatpush1.bf16.msra.mxu0 0
        %986 = vmatprep.subr.bf16.mxu0 0
        %987 = vmatpush1.bf16.msra.mxu0 0
        %988 = vmatprep.subr.bf16.mxu0 0
        %989 = vmatpush1.bf16.msra.mxu0 0
        %990 = vmatprep.subr.bf16.mxu0 0
        %991 = vmatpush1.bf16.msra.mxu0 0
        %992 = vmatprep.mubr.bf16.mxu0 %v955
        %993 = vmatmul.mubr.bf16.gmra.mrb[0].mxu0 %v948
        %v994 = vpop.f32.mrb[0].mxu0
        %v995 = vadd.f32 0.0, %v994
        %v996 = vpop.f32.mrb[0].mxu0
        %v997 = vadd.f32 0.0, %v996
        %v998 = vpop.f32.mrb[0].mxu0
        %v999 = vadd.f32 0.0, %v998
        %v1000 = vpop.f32.mrb[0].mxu0
        %v1001 = vadd.f32 0.0, %v1000
        %1002 = vmatprep.mubr.bf16.mxu0 %v958
        %1003 = vmatmul.mubr.bf16.gmra.mrb[0].mxu0 %v950
        %v1004 = vpop.f32.mrb[0].mxu0
        %v1005 = vadd.f32 0.0, %v1004
        %v1006 = vpop.f32.mrb[0].mxu0
        %v1007 = vadd.f32 0.0, %v1006
        %v1008 = vpop.f32.mrb[0].mxu0
        %v1009 = vpop.f32.mrb[0].mxu0
        %1010 = vdwg.mxu0
        %v1011 = vmax.f32 %v995, 0.0
        %v1012 = vmax.f32 %v997, 0.0
        %v1013 = vmax.f32 %v999, 0.0
        %v1014 = vmax.f32 %v1001, 0.0
        %v1015 = vmax.f32 %v1005, 0.0
        %v1016 = vmax.f32 %v1007, 0.0
        %1017 = vrot.lane.b32.xlu0 %v1011, 17
        %v1018 = vpop.permute.xlu0 %1017
        %1019 = vrot.lane.b32.xlu0 %v1013, 17
        %v1020 = vpop.permute.xlu0 %1019
        %1021 = vrot.lane.b32.xlu0 %v1015, 17
        %v1022 = vpop.permute.xlu0 %1021
        %1023 = vrot.lane.b32.xlu0 %v1012, 17
        %v1024 = vpop.permute.xlu0 %1023
        %1025 = vrot.lane.b32.xlu0 %v1014, 17
        %v1026 = vpop.permute.xlu0 %1025
        %1027 = vrot.lane.b32.xlu0 %v1016, 17
        %v1028 = vpop.permute.xlu0 %1027
        %v1029 = vsel %vm487, %v1018, %v1024
        %v1030 = vsel %vm487, %v1020, %v1026
        %v1031 = vsel %vm487, %v1022, %v1028
        %v1032 = vsel %vm487, %v1024, %v1018
        %v1033 = vsel %vm487, %v1026, %v1020
        %v1034 = vsel %vm487, %v1028, %v1022
        %v1035 = vmul.f32 %v1032, %v501
        %v1036 = vmul.f32 %v1029, %v505
        %v1037 = vmul.f32 %v1033, %v501
        %v1038 = vmul.f32 %v1030, %v505
        %v1039 = vmul.f32 %v1034, %v501
        %v1040 = vmul.f32 %v1031, %v505
        %1041 = vrot.lane.b32.xlu0 %v1011, 16
        %v1042 = vpop.permute.xlu0 %1041
        %1043 = vrot.lane.b32.xlu0 %v1013, 16
        %v1044 = vpop.permute.xlu0 %1043
        %1045 = vrot.lane.b32.xlu0 %v1015, 16
        %v1046 = vpop.permute.xlu0 %1045
        %1047 = vrot.lane.b32.xlu0 %v1012, 16
        %v1048 = vpop.permute.xlu0 %1047
        %1049 = vrot.lane.b32.xlu0 %v1014, 16
        %v1050 = vpop.permute.xlu0 %1049
        %1051 = vrot.lane.b32.xlu0 %v1016, 16
        %v1052 = vpop.permute.xlu0 %1051
        %v1053 = vsel %vm532, %v1042, %v1048
        %v1054 = vsel %vm532, %v1044, %v1050
        %v1055 = vsel %vm532, %v1046, %v1052
        %v1056 = vsel %vm532, %v1048, %v1042
        %v1057 = vsel %vm532, %v1050, %v1044
        %v1058 = vsel %vm532, %v1052, %v1046
        %v1059 = vmul.f32 %v1056, %v547
        %v1060 = vmul.f32 %v1053, %v551
        %v1061 = vmul.f32 %v1057, %v547
        %v1062 = vmul.f32 %v1054, %v551
        %v1063 = vmul.f32 %v1058, %v547
        %v1064 = vmul.f32 %v1055, %v551
        %1065 = vrot.lane.b32.xlu0 %v1011, 15
        %v1066 = vpop.permute.xlu0 %1065
        %1067 = vrot.lane.b32.xlu0 %v1013, 15
        %v1068 = vpop.permute.xlu0 %1067
        %1069 = vrot.lane.b32.xlu0 %v1015, 15
        %v1070 = vpop.permute.xlu0 %1069
        %1071 = vrot.lane.b32.xlu0 %v1012, 15
        %v1072 = vpop.permute.xlu0 %1071
        %1073 = vrot.lane.b32.xlu0 %v1014, 15
        %v1074 = vpop.permute.xlu0 %1073
        %1075 = vrot.lane.b32.xlu0 %v1016, 15
        %v1076 = vpop.permute.xlu0 %1075
        %v1077 = vsel %vm578, %v1066, %v1072
        %v1078 = vsel %vm578, %v1068, %v1074
        %v1079 = vsel %vm578, %v1070, %v1076
        %v1080 = vsel %vm578, %v1072, %v1066
        %v1081 = vsel %vm578, %v1074, %v1068
        %v1082 = vsel %vm578, %v1076, %v1070
        %v1083 = vmul.f32 %v1080, %v593
        %v1084 = vmul.f32 %v1077, %v597
        %v1085 = vmul.f32 %v1081, %v593
        %v1086 = vmul.f32 %v1078, %v597
        %v1087 = vmul.f32 %v1082, %v593
        %v1088 = vmul.f32 %v1079, %v597
        %1089 = vrot.lane.b32.xlu0 %v1011, 1
        %v1090 = vpop.permute.xlu0 %1089
        %1091 = vrot.lane.b32.xlu0 %v1013, 1
        %v1092 = vpop.permute.xlu0 %1091
        %1093 = vrot.lane.b32.xlu0 %v1015, 1
        %v1094 = vpop.permute.xlu0 %1093
        %1095 = vrot.lane.b32.xlu0 %v1012, 1
        %v1096 = vpop.permute.xlu0 %1095
        %1097 = vrot.lane.b32.xlu0 %v1014, 1
        %v1098 = vpop.permute.xlu0 %1097
        %1099 = vrot.lane.b32.xlu0 %v1016, 1
        %v1100 = vpop.permute.xlu0 %1099
        %v1101 = vsel %vm624, %v1090, %v1096
        %v1102 = vsel %vm624, %v1092, %v1098
        %v1103 = vsel %vm624, %v1094, %v1100
        %v1104 = vsel %vm624, %v1096, %v1090
        %v1105 = vsel %vm624, %v1098, %v1092
        %v1106 = vsel %vm624, %v1100, %v1094
        %v1107 = vmul.f32 %v1104, %v639
        %v1108 = vmul.f32 %v1101, %v643
        %v1109 = vmul.f32 %v1105, %v639
        %v1110 = vmul.f32 %v1102, %v643
        %v1111 = vmul.f32 %v1106, %v639
        %v1112 = vmul.f32 %v1103, %v643
        %1113 = vrot.lane.b32.xlu0 %v1011, 127
        %v1114 = vpop.permute.xlu0 %1113
        %1115 = vrot.lane.b32.xlu0 %v1013, 127
        %v1116 = vpop.permute.xlu0 %1115
        %1117 = vrot.lane.b32.xlu0 %v1015, 127
        %v1118 = vpop.permute.xlu0 %1117
        %1119 = vrot.lane.b32.xlu0 %v1012, 127
        %v1120 = vpop.permute.xlu0 %1119
        %1121 = vrot.lane.b32.xlu0 %v1014, 127
        %v1122 = vpop.permute.xlu0 %1121
        %1123 = vrot.lane.b32.xlu0 %v1016, 127
        %v1124 = vpop.permute.xlu0 %1123
        %v1125 = vsel %vm670, %v1114, %v1120
        %v1126 = vsel %vm670, %v1116, %v1122
        %v1127 = vsel %vm670, %v1118, %v1124
        %v1128 = vsel %vm670, %v1120, %v1114
        %v1129 = vsel %vm670, %v1122, %v1116
        %v1130 = vsel %vm670, %v1124, %v1118
        %v1131 = vmul.f32 %v1125, %v685
        %v1132 = vmul.f32 %v1128, %v689
        %v1133 = vmul.f32 %v1126, %v685
        %v1134 = vmul.f32 %v1129, %v689
        %v1135 = vmul.f32 %v1127, %v685
        %v1136 = vmul.f32 %v1130, %v689
        %1137 = vrot.lane.b32.xlu0 %v1011, 113
        %v1138 = vpop.permute.xlu0 %1137
        %1139 = vrot.lane.b32.xlu0 %v1013, 113
        %v1140 = vpop.permute.xlu0 %1139
        %1141 = vrot.lane.b32.xlu0 %v1015, 113
        %v1142 = vpop.permute.xlu0 %1141
        %1143 = vrot.lane.b32.xlu0 %v1012, 113
        %v1144 = vpop.permute.xlu0 %1143
        %1145 = vrot.lane.b32.xlu0 %v1014, 113
        %v1146 = vpop.permute.xlu0 %1145
        %1147 = vrot.lane.b32.xlu0 %v1016, 113
        %v1148 = vpop.permute.xlu0 %1147
        %v1149 = vsel %vm716, %v1138, %v1144
        %v1150 = vsel %vm716, %v1140, %v1146
        %v1151 = vsel %vm716, %v1142, %v1148
        %v1152 = vsel %vm716, %v1144, %v1138
        %v1153 = vsel %vm716, %v1146, %v1140
        %v1154 = vsel %vm716, %v1148, %v1142
        %v1155 = vmul.f32 %v1149, %v731
        %v1156 = vmul.f32 %v1152, %v735
        %v1157 = vmul.f32 %v1150, %v731
        %v1158 = vmul.f32 %v1153, %v735
        %v1159 = vmul.f32 %v1151, %v731
        %v1160 = vmul.f32 %v1154, %v735
        %1161 = vrot.lane.b32.xlu0 %v1011, 112
        %v1162 = vpop.permute.xlu0 %1161
        %1163 = vrot.lane.b32.xlu0 %v1013, 112
        %v1164 = vpop.permute.xlu0 %1163
        %1165 = vrot.lane.b32.xlu0 %v1015, 112
        %v1166 = vpop.permute.xlu0 %1165
        %1167 = vrot.lane.b32.xlu0 %v1012, 112
        %v1168 = vpop.permute.xlu0 %1167
        %1169 = vrot.lane.b32.xlu0 %v1014, 112
        %v1170 = vpop.permute.xlu0 %1169
        %1171 = vrot.lane.b32.xlu0 %v1016, 112
        %v1172 = vpop.permute.xlu0 %1171
        %v1173 = vsel %vm762, %v1162, %v1168
        %v1174 = vsel %vm762, %v1164, %v1170
        %v1175 = vsel %vm762, %v1166, %v1172
        %v1176 = vsel %vm762, %v1168, %v1162
        %v1177 = vsel %vm762, %v1170, %v1164
        %v1178 = vsel %vm762, %v1172, %v1166
        %v1179 = vmul.f32 %v1173, %v777
        %v1180 = vmul.f32 %v1176, %v781
        %v1181 = vmul.f32 %v1174, %v777
        %v1182 = vmul.f32 %v1177, %v781
        %v1183 = vmul.f32 %v1175, %v777
        %v1184 = vmul.f32 %v1178, %v781
        %1185 = vrot.lane.b32.xlu0 %v1011, 111
        %v1186 = vpop.permute.xlu0 %1185
        %1187 = vrot.lane.b32.xlu0 %v1013, 111
        %v1188 = vpop.permute.xlu0 %1187
        %1189 = vrot.lane.b32.xlu0 %v1015, 111
        %v1190 = vpop.permute.xlu0 %1189
        %1191 = vrot.lane.b32.xlu0 %v1012, 111
        %v1192 = vpop.permute.xlu0 %1191
        %1193 = vrot.lane.b32.xlu0 %v1014, 111
        %v1194 = vpop.permute.xlu0 %1193
        %1195 = vrot.lane.b32.xlu0 %v1016, 111
        %v1196 = vpop.permute.xlu0 %1195
        %v1197 = vsel %vm808, %v1186, %v1192
        %v1198 = vsel %vm808, %v1188, %v1194
        %v1199 = vsel %vm808, %v1190, %v1196
        %v1200 = vsel %vm808, %v1192, %v1186
        %v1201 = vsel %vm808, %v1194, %v1188
        %v1202 = vsel %vm808, %v1196, %v1190
        %v1203 = vmul.f32 %v1197, %v823
        %v1204 = vmul.f32 %v1200, %v827
        %v1205 = vmul.f32 %v1198, %v823
        %v1206 = vmul.f32 %v1201, %v827
        %v1207 = vmul.f32 %v1199, %v823
        %v1208 = vmul.f32 %v1202, %v827
        %v1209 = vld [vmem:[#allocation7] sm:$0xff]
        %v1210 = vld [vmem:[#allocation7 + $0x8] sm:$0xff]
        %v1211 = vld [vmem:[#allocation7 + $0x10] sm:$0xff]
        %v1212 = vld [vmem:[#allocation7 + $0x18] sm:$0xff]
        %v1213 = vpack.c.bf16 %v1037, %v1035
        %v1214 = vpack.c.bf16 %v1038, %v1036
        %v1215 = vpack.c.bf16 %v1059, %v1039
        %v1216 = vpack.c.bf16 %v1060, %v1040
        %v1217 = vpack.c.bf16 %v1063, %v1061
        %v1218 = vpack.c.bf16 %v1064, %v1062
        %v1219 = vpack.c.bf16 %v1085, %v1083
        %v1220 = vpack.c.bf16 %v1086, %v1084
        %v1221 = vpack.c.bf16 %v1107, %v1087
        %v1222 = vpack.c.bf16 %v1108, %v1088
        %v1223 = vpack.c.bf16 %v1111, %v1109
        %v1224 = vpack.c.bf16 %v1112, %v1110
        %v1225 = vpack.c.bf16 %v1013, %v1011
        %v1226 = vpack.c.bf16 %v1014, %v1012
        %v1227 = vpack.c.bf16 %v1131, %v1015
        %v1228 = vpack.c.bf16 %v1132, %v1016
        %v1229 = vpack.c.bf16 %v1135, %v1133
        %v1230 = vpack.c.bf16 %v1136, %v1134
        %v1231 = vpack.c.bf16 %v1157, %v1155
        %v1232 = vpack.c.bf16 %v1158, %v1156
        %v1233 = vpack.c.bf16 %v1179, %v1159
        %v1234 = vpack.c.bf16 %v1180, %v1160
        %v1235 = vpack.c.bf16 %v1183, %v1181
        %v1236 = vpack.c.bf16 %v1184, %v1182
        %v1237 = vpack.c.bf16 %v1205, %v1203
        %v1238 = vpack.c.bf16 %v1206, %v1204
        %v1239 = vpack.c.bf16 %v1207, %v1207
        %v1240 = vpack.c.bf16 %v1208, %v1208
        %v1245 = vunpack.c.l.b16 %v1209
        %v1246 = vunpack.c.h.b16 %v1209
        %v1247 = vunpack.c.l.b16 %v1210
        %v1248 = vunpack.c.h.b16 %v1210
        %v1249 = vunpack.c.l.b16 %v1211
        %v1250 = vunpack.c.h.b16 %v1211
        %v1251 = vunpack.c.l.b16 %v1212
        %v1252 = vunpack.c.h.b16 %v1212
        %v1253 = vpack.c.b16 %v1247, %v1245
        %v1254 = vpack.c.b16 %v1248, %v1246
        %v1255 = vpack.c.b16 %v1251, %v1249
        %v1256 = vpack.c.b16 %v1252, %v1250
        %vm1259 = vcmask 719872
        %v1261 = vsel %vm1259, %v1254, 0
        %v1264 = vsel %vm1259, %v1256, 0
        %v1267 = vsel %vm387, %v1239, 0
        %v1270 = vsel %vm387, %v1240, 0
        %1272 = vmatprep.subr.bf16.mxu0 %v1214
        %1273 = vmatpush1.bf16.msra.mxu0 %v1213
        %1274 = vmatprep.subr.bf16.mxu0 %v1216
        %1275 = vmatpush1.bf16.msra.mxu0 %v1215
        %1276 = vmatprep.subr.bf16.mxu0 %v1218
        %1277 = vmatpush1.bf16.msra.mxu0 %v1217
        %1278 = vmatprep.subr.bf16.mxu0 %v1220
        %1279 = vmatpush1.bf16.msra.mxu0 %v1219
        %1280 = vmatprep.subr.bf16.mxu0 %v1222
        %1281 = vmatpush1.bf16.msra.mxu0 %v1221
        %1282 = vmatprep.subr.bf16.mxu0 %v1224
        %1283 = vmatpush1.bf16.msra.mxu0 %v1223
        %1284 = vmatprep.subr.bf16.mxu0 %v1226
        %1285 = vmatpush1.bf16.msra.mxu0 %v1225
        %1286 = vmatprep.subr.bf16.mxu0 %v1228
        %1287 = vmatpush1.bf16.msra.mxu0 %v1227
        %1288 = vmatprep.subr.bf16.mxu0 %v1230
        %1289 = vmatpush1.bf16.msra.mxu0 %v1229
        %1290 = vmatprep.subr.bf16.mxu0 %v1232
        %1291 = vmatpush1.bf16.msra.mxu0 %v1231
        %1292 = vmatprep.subr.bf16.mxu0 %v1234
        %1293 = vmatpush1.bf16.msra.mxu0 %v1233
        %1294 = vmatprep.subr.bf16.mxu0 %v1236
        %1295 = vmatpush1.bf16.msra.mxu0 %v1235
        %1296 = vmatprep.subr.bf16.mxu0 %v1238
        %1297 = vmatpush1.bf16.msra.mxu0 %v1237
        %1298 = vmatprep.subr.bf16.mxu0 %v1270
        %1299 = vmatpush1.bf16.msra.mxu0 %v1267
        %1300 = vmatprep.subr.bf16.mxu0 0
        %1301 = vmatpush1.bf16.msra.mxu0 0
        %1302 = vmatprep.subr.bf16.mxu0 0
        %1303 = vmatpush1.bf16.msra.mxu0 0
        %1304 = vmatprep.mubr.bf16.mxu0 %v1261
        %1305 = vmatmul.mubr.bf16.gmra.mrb[0].mxu0 %v1253
        %v1306 = vpop.f32.mrb[0].mxu0
        %v1307 = vadd.f32 0.0, %v1306
        %v1308 = vpop.f32.mrb[0].mxu0
        %v1309 = vadd.f32 0.0, %v1308
        %v1310 = vpop.f32.mrb[0].mxu0
        %v1311 = vadd.f32 0.0, %v1310
        %v1312 = vpop.f32.mrb[0].mxu0
        %v1313 = vadd.f32 0.0, %v1312
        %1314 = vmatprep.mubr.bf16.mxu0 %v1264
        %1315 = vmatmul.mubr.bf16.gmra.mrb[0].mxu0 %v1255
        %v1316 = vpop.f32.mrb[0].mxu0
        %v1317 = vadd.f32 0.0, %v1316
        %v1318 = vpop.f32.mrb[0].mxu0
        %v1319 = vadd.f32 0.0, %v1318
        %v1320 = vpop.f32.mrb[0].mxu0
        %v1321 = vadd.f32 0.0, %v1320
        %v1322 = vpop.f32.mrb[0].mxu0
        %v1323 = vadd.f32 0.0, %v1322
        %1324 = vdwg.mxu0
        %v1325 = vmax.f32 %v1307, 0.0
        %v1326 = vmax.f32 %v1309, 0.0
        %v1327 = vmax.f32 %v1311, 0.0
        %v1328 = vmax.f32 %v1313, 0.0
        %v1329 = vmax.f32 %v1317, 0.0
        %v1330 = vmax.f32 %v1319, 0.0
        %v1331 = vmax.f32 %v1321, 0.0
        %v1332 = vmax.f32 %v1323, 0.0
        %v1333 = vld [vmem:[%s6] sm:$0xf]
        %v1334 = vpack.c.bf16 %v459, %v457
        %v1335 = vpack.c.bf16 %v460, %v458
        %v1336 = vpack.c.bf16 %v916, %v914
        %v1337 = vpack.c.bf16 %v917, %v915
        %v1338 = vpack.c.bf16 %v1327, %v1325
        %v1339 = vpack.c.bf16 %v1328, %v1326
        %v1340 = vpack.c.bf16 %v1331, %v1329
        %v1341 = vpack.c.bf16 %v1332, %v1330
        %v1342 = vld [vmem:[%s7] sm:$0xff]
        %1344 = vset.pattern.permute.xlu0 0
        %1345 = vperm.xlu0 %1344, %v1342
        %v1346 = vpop.permute.xlu0 %1345
        %vm1348 = vcmask 523264
        %v1350 = vsel %vm1348, %v1333, 0
        %1352 = vmatprep.subr.bf16.mxu0 %v1335
        %1353 = vmatpush1.bf16.msra.mxu0 %v1334
        %1354 = vmatprep.subr.bf16.mxu0 %v1337
        %1355 = vmatpush1.bf16.msra.mxu0 %v1336
        %1356 = vmatprep.subr.bf16.mxu0 %v1339
        %1357 = vmatpush1.bf16.msra.mxu0 %v1338
        %1358 = vmatprep.subr.bf16.mxu0 %v1341
        %1359 = vmatpush1.bf16.msra.mxu0 %v1340
        %1360 = vmatprep.subr.bf16.mxu0 0
        %1361 = vmatpush1.bf16.msra.mxu0 0
        %1362 = vmatprep.subr.bf16.mxu0 0
        %1363 = vmatpush1.bf16.msra.mxu0 0
        %1364 = vmatprep.subr.bf16.mxu0 0
        %1365 = vmatpush1.bf16.msra.mxu0 0
        %1366 = vmatprep.subr.bf16.mxu0 0
        %1367 = vmatpush1.bf16.msra.mxu0 0
        %1368 = vmatprep.subr.bf16.mxu0 0
        %1369 = vmatpush1.bf16.msra.mxu0 0
        %1370 = vmatprep.subr.bf16.mxu0 0
        %1371 = vmatpush1.bf16.msra.mxu0 0
        %1372 = vmatprep.subr.bf16.mxu0 0
        %1373 = vmatpush1.bf16.msra.mxu0 0
        %1374 = vmatprep.subr.bf16.mxu0 0
        %1375 = vmatpush1.bf16.msra.mxu0 0
        %1376 = vmatprep.subr.bf16.mxu0 0
        %1377 = vmatpush1.bf16.msra.mxu0 0
        %1378 = vmatprep.subr.bf16.mxu0 0
        %1379 = vmatpush1.bf16.msra.mxu0 0
        %1380 = vmatprep.subr.bf16.mxu0 0
        %1381 = vmatpush1.bf16.msra.mxu0 0
        %1382 = vmatprep.subr.bf16.mxu0 0
        %1383 = vmatpush1.bf16.msra.mxu0 0
        %1384 = vmatprep.mubr.bf16.mxu0 0
        %1385 = vmatmul.mubr.bf16.gmra.mrb[0].mxu0 %v1350
        %v1386 = vpop.f32.mrb[0].mxu0
        %v1387 = vadd.f32 %v1346, %v1386
        %v1388 = vpop.f32.mrb[0].mxu0
        %v1389 = vadd.f32 %v1346, %v1388
        %v1390 = vpop.f32.mrb[0].mxu0
        %v1391 = vpop.f32.mrb[0].mxu0
        %1392 = vdwg.mxu0
        %v1393 = vmul.f32 %v1387, 0.17
        %v1394 = vmul.f32 %v1389, 0.17
        %v1395 = vadd.f32 %v352, %v1393
        %v1396 = vadd.f32 %v353, %v1394
        %v1397 = vmax.f32 %v1395, 0.0
        %v1398 = vmax.f32 %v1396, 0.0
        %1399 = vst [vmem:[%s343] sm:$0xff] %v1397
        %1400 = vst [vmem:[%s343 + $0x8] sm:$0xff] %v1398
        %s1401 = sand.u32 %s205, 1
        %s1402 = scalar_lea.sflag [#allocation4], %s1401
        %s1403 = sand.u32 %s205, 1
        %s1404 = smul.addr %s1403, 16
        %s1405 = scalar_lea.vmem [#allocation8], %s1404
        // Predicated region
        $region65: #{tpu_custom_call.1} parent=51 // pred_check
          %p1406 = pneg %p215
        $region66: #{tpu_custom_call.1} parent=51 // pred_check_branch
          %1408 = sbr.rel (%p1406) target = $region68
        $region67: #{tpu_custom_call.1} parent=51 // pred_region
          %s1409 = smul.u32 2, %s24
          %s1411 = ssub.s32 256, 256
          %1412 = vsyncadd %s1402, %s1411
          %s1413 = smul.addr %s1409, 128
          %s1414 = scalar_lea.hbm %s8, %s1413
          %s1416 = sshll.u32 %s1405, 4
          %s1417 = int_to_ptr.vmem [resolvable:$true] %s1416
          %1419 = dma.vmem_to_hbm [thread:$0]  %s1417, 256, %s1414, %s1402
        $region68: #{tpu_custom_call.1} parent=51 // pred_fallthru
          _
      $region52: #{tpu_custom_call.1} parent=5 // pred_fallthru
        _
      %p1420 = scmp.le.s32.totalorder 2, %s19
      // Predicated region
      $region69: #{tpu_custom_call.1} parent=5 // pred_check
        %p1421 = pneg %p1420
      $region70: #{tpu_custom_call.1} parent=5 // pred_check_branch
        %1423 = sbr.rel (%p1421) target = $region72
      $region71: #{tpu_custom_call.1} parent=5 // pred_region
        %s1424 = ssub.s32 %s19, 2
        // Predicated region
        $region73: #{tpu_custom_call.1} parent=71 // pred_check
          %p1425 = pneg %p221
        $region74: #{tpu_custom_call.1} parent=71 // pred_check_branch
          %1427 = sbr.rel (%p1425) target = $region76
        $region75: #{tpu_custom_call.1} parent=71 // pred_region
          %s1428 = sand.u32 %s206, 1
          %s1429 = scalar_lea.sflag [#allocation4], %s1428
          %s1430 = sand.u32 %s206, 1
          %s1431 = smul.addr %s1430, 16
          %s1432 = scalar_lea.vmem [#allocation8], %s1431
          %1433 = dma.done %s1429, 256
        $region76: #{tpu_custom_call.1} parent=71 // pred_fallthru
          _
      $region72: #{tpu_custom_call.1} parent=5 // pred_fallthru
        _
    $region6: #{tpu_custom_call.1} parent=1 // loop_footer
      %s23 = sadd.s32 1, %s19
    $region7: #{tpu_custom_call.1} parent=1 // loop_footer_branch
      %18 = sbr.rel target = $region3
    $region8: #{tpu_custom_call.1} parent=1 // loop_exit
      _
    %1434 = vsyncpa [#allocation3], 1
    %s1435 = scalar_lea.sflag [#allocation3], 1
    %1436 = vsyncpa %s1435, 1
    %1437 = vsyncpa [#allocation6], 1
    %1438 = vsyncpa [#allocation4], 1
    %s1439 = scalar_lea.sflag [#allocation4], 1
    %1440 = vsyncpa %s1439, 1

</llo_original>
